<compile_context>
chip_gen: v6e
topology: v6e:2x2x1
jax: 0.10.0
libtpu: 0.0.40
codegen_flags: <defaults>
</compile_context>

<pallas_src>
import jax
import jax.numpy as jnp
import numpy as np
from jax.experimental import pallas as pl
from jax.experimental.pallas import tpu as pltpu


def lstm_classifier_kernel(x_ref,
                           wih1_ref, b1_ref,
                           wcomb_ref, b2_ref,
                           wfc1_ref, bfc1_ref,
                           wfc2_ref, bfc2_ref,
                           out_ref):
    T, Bp, D = x_ref.shape
    G1 = b1_ref.shape[1]          # 4*H1
    G2 = b2_ref.shape[1]          # 4*H2
    H1 = G1 // 4
    H2 = G2 // 4

    # ---- hoist all weight / bias loads (read once, stay vreg/VMEM resident) ----
    wcomb = wcomb_ref[...]                                   # (H1+H2, 4H2+4H1)
    b2 = jnp.broadcast_to(b2_ref[...], (Bp, G2))             # hoisted broadcast
    wfc1 = wfc1_ref[...]
    wfc2 = wfc2_ref[...]

    # ---- layer-1 input projection for all timesteps in one matmul (bias folded) ----
    x_flat = x_ref[...].reshape(T * Bp, D)                   # (T*Bp, D)
    xg = jnp.dot(x_flat, wih1_ref[...],
                 preferred_element_type=jnp.float32) + b1_ref[...]
    xg = xg.reshape(T, Bp, G1)                               # (T, Bp, 4H1)

    def cell(gates, c_prev, H):
        # gate columns are pre-permuted to [i, f, o, g]:
        # sigmoid only over the first 3H lanes, tanh only over the last H lanes.
        sig = jax.nn.sigmoid(gates[:, :3 * H])
        g = jnp.tanh(gates[:, 3 * H:])
        i = sig[:, :H]
        f = sig[:, H:2 * H]
        o = sig[:, 2 * H:3 * H]
        c_new = f * c_prev + i * g
        h_new = o * jnp.tanh(c_new)
        return h_new, c_new

    c1 = jnp.zeros((Bp, H1), jnp.float32)
    h2 = jnp.zeros((Bp, H2), jnp.float32)
    c2 = jnp.zeros((Bp, H2), jnp.float32)
    rec1 = jnp.zeros((Bp, G1), jnp.float32)   # h1_{t-1} @ whh1 (h1_{-1} == 0)

    # fully unrolled time loop (T is small and static);
    # one fused (Bp, H1+H2) @ (H1+H2, 4H2+4H1) MXU push per step.
    for t in range(T):
        # layer 1: recurrent term was produced by the previous step's fused dot
        gates1 = xg[t] + rec1
        h1, c1 = cell(gates1, c1, H1)
        # TODO(synk): dropout1/dropout2 are identity (module evaluated in eval mode)
        # fused: layer-2 gates for step t + layer-1 recurrent matmul for step t+1
        hh = jnp.concatenate([h1, h2], axis=1)               # (Bp, H1+H2)
        r = jnp.dot(hh, wcomb, preferred_element_type=jnp.float32)
        gates2 = r[:, :G2] + b2
        rec1 = r[:, G2:]                                     # = h1_t @ whh1
        h2, c2 = cell(gates2, c2, H2)

    # ---- MLP head: fc1 -> relu -> fc2 on h_n[-1] of lstm2 ----
    z = jnp.dot(h2, wfc1, preferred_element_type=jnp.float32) + bfc1_ref[...]
    z = jnp.maximum(z, 0.0)
    out_ref[...] = jnp.dot(z, wfc2, preferred_element_type=jnp.float32) + bfc2_ref[...]


def _permute_gate_cols(w, H):
    """Reorder gate columns from PyTorch [i, f, g, o] to kernel order [i, f, o, g]."""
    return jnp.concatenate(
        [w[..., :2 * H], w[..., 3 * H:4 * H], w[..., 2 * H:3 * H]], axis=-1)


def prepare_kernel_params(params):
    """One-time static weight prep: gate permutation + fused/stacked weights."""
    H1 = params["whh1"].shape[0]
    H2 = params["whh2"].shape[0]

    wih1 = _permute_gate_cols(params["wih1"], H1)            # (D, 4H1)
    whh1 = _permute_gate_cols(params["whh1"], H1)            # (H1, 4H1)
    b1 = _permute_gate_cols(params["b1"], H1)                # (1, 4H1)
    wih2 = _permute_gate_cols(params["wih2"], H2)            # (H1, 4H2)
    whh2 = _permute_gate_cols(params["whh2"], H2)            # (H2, 4H2)
    b2 = _permute_gate_cols(params["b2"], H2)                # (1, 4H2)

    # stacked layer-2 weight (rows = [h1; h2]) and zero-padded layer-1 recurrent
    # weight, concatenated along lanes -> single 256-lane fused weight.
    w2 = jnp.concatenate([wih2, whh2], axis=0)               # (H1+H2, 4H2)
    whh1_pad = jnp.concatenate(
        [whh1, jnp.zeros((H2, 4 * H1), jnp.float32)], axis=0)  # (H1+H2, 4H1)
    wcomb = jnp.concatenate([w2, whh1_pad], axis=1)          # (H1+H2, 4H2+4H1)

    return {
        "wih1": wih1, "b1": b1,
        "wcomb": wcomb, "b2": b2,
        "wfc1": params["wfc1"], "bfc1": params["bfc1"],
        "wfc2": params["wfc2"], "bfc2": params["bfc2"],
    }


@jax.jit
def lstm_classifier_forward(x, kparams):
    """x: (B, T, D) batch-first, like the PyTorch module. kparams: prepare_kernel_params()."""
    B, T, D = x.shape
    C = kparams["wfc2"].shape[1]

    # pad batch to a full 8-row sublane tile; extra rows sliced off afterwards
    B_pad = max(8, ((B + 7) // 8) * 8)
    x_tm = jnp.transpose(x, (1, 0, 2))                       # (T, B, D) time-major
    x_tm = jnp.pad(x_tm, ((0, 0), (0, B_pad - B), (0, 0)))   # (T, B_pad, D)

    args = (x_tm,
            kparams["wih1"], kparams["b1"],
            kparams["wcomb"], kparams["b2"],
            kparams["wfc1"], kparams["bfc1"],
            kparams["wfc2"], kparams["bfc2"])

    vmem = pl.BlockSpec(memory_space=pltpu.MemorySpace.VMEM)
    out = pl.pallas_call(
        lstm_classifier_kernel,
        out_shape=jax.ShapeDtypeStruct((B_pad, C), jnp.float32),
        in_specs=[vmem] * len(args),
        out_specs=vmem,
    )(*args)
    return out[:B]


def init_params(key, input_size, hidden_sizes, num_classes):
    """Deterministic PyTorch-style uniform init; weights stored pre-transposed,
    gate columns in PyTorch order [i, f, g, o]."""
    H1, H2 = hidden_sizes
    ks = jax.random.split(key, 12)

    def u(k, shape, bound):
        return jax.random.uniform(k, shape, jnp.float32, -bound, bound)

    s1 = 1.0 / np.sqrt(H1)
    s2 = 1.0 / np.sqrt(H2)
    params = {
        # lstm1: W_ih (4H1, D) -> (D, 4H1); W_hh (4H1, H1) -> (H1, 4H1)
        "wih1": u(ks[0], (input_size, 4 * H1), s1),
        "whh1": u(ks[1], (H1, 4 * H1), s1),
        "b1":   u(ks[2], (1, 4 * H1), s1) + u(ks[3], (1, 4 * H1), s1),  # b_ih + b_hh
        # lstm2
        "wih2": u(ks[4], (H1, 4 * H2), s2),
        "whh2": u(ks[5], (H2, 4 * H2), s2),
        "b2":   u(ks[6], (1, 4 * H2), s2) + u(ks[7], (1, 4 * H2), s2),
        # fc1: (16, H2) -> (H2, 16)
        "wfc1": u(ks[8], (H2, 16), 1.0 / np.sqrt(H2)),
        "bfc1": u(ks[9], (1, 16), 1.0 / np.sqrt(H2)),
        # fc2: (C, 16) -> (16, C)
        "wfc2": u(ks[10], (16, num_classes), 1.0 / np.sqrt(16)),
        "bfc2": u(ks[11], (1, num_classes), 1.0 / np.sqrt(16)),
    }
    return params


def reference_forward(x, params):
    """Pure-JAX reference mirroring the PyTorch module (eval mode)."""
    B, T, D = x.shape

    def run_lstm(seq, wih, whh, b, H):
        h = jnp.zeros((B, H), jnp.float32)
        c = jnp.zeros((B, H), jnp.float32)
        outs = []
        for t in range(T):
            g = seq[:, t, :] @ wih + h @ whh + b
            i = jax.nn.sigmoid(g[:, 0 * H:1 * H])
            f = jax.nn.sigmoid(g[:, 1 * H:2 * H])
            gg = jnp.tanh(g[:, 2 * H:3 * H])
            o = jax.nn.sigmoid(g[:, 3 * H:4 * H])
            c = f * c + i * gg
            h = o * jnp.tanh(c)
            outs.append(h)
        return jnp.stack(outs, axis=1), h

    H1 = params["whh1"].shape[0]
    H2 = params["whh2"].shape[0]
    seq1, _ = run_lstm(x, params["wih1"], params["whh1"], params["b1"], H1)
    _, h_n = run_lstm(seq1, params["wih2"], params["whh2"], params["b2"], H2)
    z = jnp.maximum(h_n @ params["wfc1"] + params["bfc1"], 0.0)
    return z @ params["wfc2"] + params["bfc2"]


if __name__ == "__main__":
    B, T, D = 2, 8, 16
    hidden_sizes = (32, 32)
    num_classes = 8

    key = jax.random.PRNGKey(0)
    kx, kp = jax.random.split(key)
    x = jax.random.normal(kx, (B, T, D), jnp.float32)
    params = init_params(kp, D, hidden_sizes, num_classes)
    kparams = prepare_kernel_params(params)   # one-time static weight prep

    out = lstm_classifier_forward(x, kparams)
    out = jax.block_until_ready(out)

    ref = reference_forward(x, params)
    np.testing.assert_allclose(np.asarray(out), np.asarray(ref), rtol=1e-5, atol=1e-5)

    print("KERNEL_OK")
</pallas_src>

<mosaic_0001>
module attributes {stable_mosaic.version = 11 : i64} {
  func.func @lstm_classifier_kernel(%arg0: memref<8x8x16xf32, #tpu.memory_space<vmem>>, %arg1: memref<16x128xf32, #tpu.memory_space<vmem>>, %arg2: memref<1x128xf32, #tpu.memory_space<vmem>>, %arg3: memref<64x256xf32, #tpu.memory_space<vmem>>, %arg4: memref<1x128xf32, #tpu.memory_space<vmem>>, %arg5: memref<32x16xf32, #tpu.memory_space<vmem>>, %arg6: memref<1x16xf32, #tpu.memory_space<vmem>>, %arg7: memref<16x8xf32, #tpu.memory_space<vmem>>, %arg8: memref<1x8xf32, #tpu.memory_space<vmem>>, %arg9: memref<8x8xf32, #tpu.memory_space<vmem>>) attributes {dimension_semantics = [], scalar_prefetch = 0 : i64, scratch_operands = 0 : i64, tpu.core_type = #tpu.core_type<tc>} {
    %c0 = arith.constant 0 : index
    %c0_0 = arith.constant 0 : index
    %0 = vector.load %arg3[%c0, %c0_0] : memref<64x256xf32, #tpu.memory_space<vmem>>, vector<64x256xf32>
    %c0_1 = arith.constant 0 : index
    %c0_2 = arith.constant 0 : index
    %1 = vector.load %arg4[%c0_1, %c0_2] : memref<1x128xf32, #tpu.memory_space<vmem>>, vector<1x128xf32>
    %2 = vector.shape_cast %1 : vector<1x128xf32> to vector<1x128xf32>
    %3 = vector.broadcast %2 : vector<1x128xf32> to vector<8x128xf32>
    %c0_3 = arith.constant 0 : index
    %c0_4 = arith.constant 0 : index
    %4 = vector.load %arg5[%c0_3, %c0_4] : memref<32x16xf32, #tpu.memory_space<vmem>>, vector<32x16xf32>
    %c0_5 = arith.constant 0 : index
    %c0_6 = arith.constant 0 : index
    %5 = vector.load %arg7[%c0_5, %c0_6] : memref<16x8xf32, #tpu.memory_space<vmem>>, vector<16x8xf32>
    %c0_7 = arith.constant 0 : index
    %c0_8 = arith.constant 0 : index
    %c0_9 = arith.constant 0 : index
    %6 = vector.load %arg0[%c0_7, %c0_8, %c0_9] : memref<8x8x16xf32, #tpu.memory_space<vmem>>, vector<8x8x16xf32>
    %7 = vector.shape_cast %6 : vector<8x8x16xf32> to vector<64x16xf32>
    %c0_10 = arith.constant 0 : index
    %c0_11 = arith.constant 0 : index
    %8 = vector.load %arg1[%c0_10, %c0_11] : memref<16x128xf32, #tpu.memory_space<vmem>>, vector<16x128xf32>
    %cst = arith.constant dense<0.000000e+00> : vector<64x128xf32>
    %9 = tpu.matmul %7, %8, %cst {dimension_numbers = #tpu.dot_dimension_numbers<[1], [0], [0], [1], [0, 0, 1, 1], [], []>} : vector<64x16xf32>, vector<16x128xf32>, vector<64x128xf32> -> vector<64x128xf32>
    %c0_12 = arith.constant 0 : index
    %c0_13 = arith.constant 0 : index
    %10 = vector.load %arg2[%c0_12, %c0_13] : memref<1x128xf32, #tpu.memory_space<vmem>>, vector<1x128xf32>
    %11 = vector.broadcast %10 : vector<1x128xf32> to vector<64x128xf32>
    %12 = arith.addf %9, %11 : vector<64x128xf32>
    %13 = vector.shape_cast %12 : vector<64x128xf32> to vector<8x8x128xf32>
    %cst_14 = arith.constant 0.000000e+00 : f32
    %14 = vector.broadcast %cst_14 : f32 to vector<8x32xf32>
    %cst_15 = arith.constant 0.000000e+00 : f32
    %15 = vector.broadcast %cst_15 : f32 to vector<8x32xf32>
    %cst_16 = arith.constant 0.000000e+00 : f32
    %16 = vector.broadcast %cst_16 : f32 to vector<8x32xf32>
    %cst_17 = arith.constant 0.000000e+00 : f32
    %17 = vector.broadcast %cst_17 : f32 to vector<8x128xf32>
    %18 = vector.extract_strided_slice %13 {offsets = [0, 0, 0], sizes = [1, 8, 128], strides = [1, 1, 1]} : vector<8x8x128xf32> to vector<1x8x128xf32>
    %19 = vector.shape_cast %18 : vector<1x8x128xf32> to vector<8x128xf32>
    %20 = arith.addf %19, %17 : vector<8x128xf32>
    %21 = vector.extract_strided_slice %20 {offsets = [0, 0], sizes = [8, 96], strides = [1, 1]} : vector<8x128xf32> to vector<8x96xf32>
    %22 = arith.negf %21 : vector<8x96xf32>
    %23 = math.exp %22 : vector<8x96xf32>
    %cst_18 = arith.constant 1.000000e+00 : f32
    %24 = vector.broadcast %cst_18 : f32 to vector<8x96xf32>
    %25 = arith.addf %24, %23 : vector<8x96xf32>
    %26 = arith.divf %24, %25 : vector<8x96xf32>
    %27 = vector.extract_strided_slice %20 {offsets = [0, 96], sizes = [8, 32], strides = [1, 1]} : vector<8x128xf32> to vector<8x32xf32>
    %28 = math.tanh %27 : vector<8x32xf32>
    %29 = vector.extract_strided_slice %26 {offsets = [0, 0], sizes = [8, 32], strides = [1, 1]} : vector<8x96xf32> to vector<8x32xf32>
    %30 = vector.extract_strided_slice %26 {offsets = [0, 32], sizes = [8, 32], strides = [1, 1]} : vector<8x96xf32> to vector<8x32xf32>
    %31 = vector.extract_strided_slice %26 {offsets = [0, 64], sizes = [8, 32], strides = [1, 1]} : vector<8x96xf32> to vector<8x32xf32>
    %32 = arith.mulf %30, %14 : vector<8x32xf32>
    %33 = arith.mulf %29, %28 : vector<8x32xf32>
    %34 = arith.addf %32, %33 : vector<8x32xf32>
    %35 = math.tanh %34 : vector<8x32xf32>
    %36 = arith.mulf %31, %35 : vector<8x32xf32>
    %37 = tpu.concatenate %36, %15 in 1 : vector<8x32xf32>, vector<8x32xf32> -> vector<8x64xf32>
    %cst_19 = arith.constant dense<0.000000e+00> : vector<8x256xf32>
    %38 = tpu.matmul %37, %0, %cst_19 {dimension_numbers = #tpu.dot_dimension_numbers<[1], [0], [0], [1], [0, 0, 1, 1], [], []>} : vector<8x64xf32>, vector<64x256xf32>, vector<8x256xf32> -> vector<8x256xf32>
    %39 = vector.extract_strided_slice %38 {offsets = [0, 0], sizes = [8, 128], strides = [1, 1]} : vector<8x256xf32> to vector<8x128xf32>
    %40 = arith.addf %39, %3 : vector<8x128xf32>
    %41 = vector.extract_strided_slice %38 {offsets = [0, 128], sizes = [8, 128], strides = [1, 1]} : vector<8x256xf32> to vector<8x128xf32>
    %42 = vector.extract_strided_slice %40 {offsets = [0, 0], sizes = [8, 96], strides = [1, 1]} : vector<8x128xf32> to vector<8x96xf32>
    %43 = arith.negf %42 : vector<8x96xf32>
    %44 = math.exp %43 : vector<8x96xf32>
    %cst_20 = arith.constant 1.000000e+00 : f32
    %45 = vector.broadcast %cst_20 : f32 to vector<8x96xf32>
    %46 = arith.addf %45, %44 : vector<8x96xf32>
    %47 = arith.divf %45, %46 : vector<8x96xf32>
    %48 = vector.extract_strided_slice %40 {offsets = [0, 96], sizes = [8, 32], strides = [1, 1]} : vector<8x128xf32> to vector<8x32xf32>
    %49 = math.tanh %48 : vector<8x32xf32>
    %50 = vector.extract_strided_slice %47 {offsets = [0, 0], sizes = [8, 32], strides = [1, 1]} : vector<8x96xf32> to vector<8x32xf32>
    %51 = vector.extract_strided_slice %47 {offsets = [0, 32], sizes = [8, 32], strides = [1, 1]} : vector<8x96xf32> to vector<8x32xf32>
    %52 = vector.extract_strided_slice %47 {offsets = [0, 64], sizes = [8, 32], strides = [1, 1]} : vector<8x96xf32> to vector<8x32xf32>
    %53 = arith.mulf %51, %16 : vector<8x32xf32>
    %54 = arith.mulf %50, %49 : vector<8x32xf32>
    %55 = arith.addf %53, %54 : vector<8x32xf32>
    %56 = math.tanh %55 : vector<8x32xf32>
    %57 = arith.mulf %52, %56 : vector<8x32xf32>
    %58 = vector.extract_strided_slice %13 {offsets = [1, 0, 0], sizes = [1, 8, 128], strides = [1, 1, 1]} : vector<8x8x128xf32> to vector<1x8x128xf32>
    %59 = vector.shape_cast %58 : vector<1x8x128xf32> to vector<8x128xf32>
    %60 = arith.addf %59, %41 : vector<8x128xf32>
    %61 = vector.extract_strided_slice %60 {offsets = [0, 0], sizes = [8, 96], strides = [1, 1]} : vector<8x128xf32> to vector<8x96xf32>
    %62 = arith.negf %61 : vector<8x96xf32>
    %63 = math.exp %62 : vector<8x96xf32>
    %cst_21 = arith.constant 1.000000e+00 : f32
    %64 = vector.broadcast %cst_21 : f32 to vector<8x96xf32>
    %65 = arith.addf %64, %63 : vector<8x96xf32>
    %66 = arith.divf %64, %65 : vector<8x96xf32>
    %67 = vector.extract_strided_slice %60 {offsets = [0, 96], sizes = [8, 32], strides = [1, 1]} : vector<8x128xf32> to vector<8x32xf32>
    %68 = math.tanh %67 : vector<8x32xf32>
    %69 = vector.extract_strided_slice %66 {offsets = [0, 0], sizes = [8, 32], strides = [1, 1]} : vector<8x96xf32> to vector<8x32xf32>
    %70 = vector.extract_strided_slice %66 {offsets = [0, 32], sizes = [8, 32], strides = [1, 1]} : vector<8x96xf32> to vector<8x32xf32>
    %71 = vector.extract_strided_slice %66 {offsets = [0, 64], sizes = [8, 32], strides = [1, 1]} : vector<8x96xf32> to vector<8x32xf32>
    %72 = arith.mulf %70, %34 : vector<8x32xf32>
    %73 = arith.mulf %69, %68 : vector<8x32xf32>
    %74 = arith.addf %72, %73 : vector<8x32xf32>
    %75 = math.tanh %74 : vector<8x32xf32>
    %76 = arith.mulf %71, %75 : vector<8x32xf32>
    %77 = tpu.concatenate %76, %57 in 1 : vector<8x32xf32>, vector<8x32xf32> -> vector<8x64xf32>
    %cst_22 = arith.constant dense<0.000000e+00> : vector<8x256xf32>
    %78 = tpu.matmul %77, %0, %cst_22 {dimension_numbers = #tpu.dot_dimension_numbers<[1], [0], [0], [1], [0, 0, 1, 1], [], []>} : vector<8x64xf32>, vector<64x256xf32>, vector<8x256xf32> -> vector<8x256xf32>
    %79 = vector.extract_strided_slice %78 {offsets = [0, 0], sizes = [8, 128], strides = [1, 1]} : vector<8x256xf32> to vector<8x128xf32>
    %80 = arith.addf %79, %3 : vector<8x128xf32>
    %81 = vector.extract_strided_slice %78 {offsets = [0, 128], sizes = [8, 128], strides = [1, 1]} : vector<8x256xf32> to vector<8x128xf32>
    %82 = vector.extract_strided_slice %80 {offsets = [0, 0], sizes = [8, 96], strides = [1, 1]} : vector<8x128xf32> to vector<8x96xf32>
    %83 = arith.negf %82 : vector<8x96xf32>
    %84 = math.exp %83 : vector<8x96xf32>
    %cst_23 = arith.constant 1.000000e+00 : f32
    %85 = vector.broadcast %cst_23 : f32 to vector<8x96xf32>
    %86 = arith.addf %85, %84 : vector<8x96xf32>
    %87 = arith.divf %85, %86 : vector<8x96xf32>
    %88 = vector.extract_strided_slice %80 {offsets = [0, 96], sizes = [8, 32], strides = [1, 1]} : vector<8x128xf32> to vector<8x32xf32>
    %89 = math.tanh %88 : vector<8x32xf32>
    %90 = vector.extract_strided_slice %87 {offsets = [0, 0], sizes = [8, 32], strides = [1, 1]} : vector<8x96xf32> to vector<8x32xf32>
    %91 = vector.extract_strided_slice %87 {offsets = [0, 32], sizes = [8, 32], strides = [1, 1]} : vector<8x96xf32> to vector<8x32xf32>
    %92 = vector.extract_strided_slice %87 {offsets = [0, 64], sizes = [8, 32], strides = [1, 1]} : vector<8x96xf32> to vector<8x32xf32>
    %93 = arith.mulf %91, %55 : vector<8x32xf32>
    %94 = arith.mulf %90, %89 : vector<8x32xf32>
    %95 = arith.addf %93, %94 : vector<8x32xf32>
    %96 = math.tanh %95 : vector<8x32xf32>
    %97 = arith.mulf %92, %96 : vector<8x32xf32>
    %98 = vector.extract_strided_slice %13 {offsets = [2, 0, 0], sizes = [1, 8, 128], strides = [1, 1, 1]} : vector<8x8x128xf32> to vector<1x8x128xf32>
    %99 = vector.shape_cast %98 : vector<1x8x128xf32> to vector<8x128xf32>
    %100 = arith.addf %99, %81 : vector<8x128xf32>
    %101 = vector.extract_strided_slice %100 {offsets = [0, 0], sizes = [8, 96], strides = [1, 1]} : vector<8x128xf32> to vector<8x96xf32>
    %102 = arith.negf %101 : vector<8x96xf32>
    %103 = math.exp %102 : vector<8x96xf32>
    %cst_24 = arith.constant 1.000000e+00 : f32
    %104 = vector.broadcast %cst_24 : f32 to vector<8x96xf32>
    %105 = arith.addf %104, %103 : vector<8x96xf32>
    %106 = arith.divf %104, %105 : vector<8x96xf32>
    %107 = vector.extract_strided_slice %100 {offsets = [0, 96], sizes = [8, 32], strides = [1, 1]} : vector<8x128xf32> to vector<8x32xf32>
    %108 = math.tanh %107 : vector<8x32xf32>
    %109 = vector.extract_strided_slice %106 {offsets = [0, 0], sizes = [8, 32], strides = [1, 1]} : vector<8x96xf32> to vector<8x32xf32>
    %110 = vector.extract_strided_slice %106 {offsets = [0, 32], sizes = [8, 32], strides = [1, 1]} : vector<8x96xf32> to vector<8x32xf32>
    %111 = vector.extract_strided_slice %106 {offsets = [0, 64], sizes = [8, 32], strides = [1, 1]} : vector<8x96xf32> to vector<8x32xf32>
    %112 = arith.mulf %110, %74 : vector<8x32xf32>
    %113 = arith.mulf %109, %108 : vector<8x32xf32>
    %114 = arith.addf %112, %113 : vector<8x32xf32>
    %115 = math.tanh %114 : vector<8x32xf32>
    %116 = arith.mulf %111, %115 : vector<8x32xf32>
    %117 = tpu.concatenate %116, %97 in 1 : vector<8x32xf32>, vector<8x32xf32> -> vector<8x64xf32>
    %cst_25 = arith.constant dense<0.000000e+00> : vector<8x256xf32>
    %118 = tpu.matmul %117, %0, %cst_25 {dimension_numbers = #tpu.dot_dimension_numbers<[1], [0], [0], [1], [0, 0, 1, 1], [], []>} : vector<8x64xf32>, vector<64x256xf32>, vector<8x256xf32> -> vector<8x256xf32>
    %119 = vector.extract_strided_slice %118 {offsets = [0, 0], sizes = [8, 128], strides = [1, 1]} : vector<8x256xf32> to vector<8x128xf32>
    %120 = arith.addf %119, %3 : vector<8x128xf32>
    %121 = vector.extract_strided_slice %118 {offsets = [0, 128], sizes = [8, 128], strides = [1, 1]} : vector<8x256xf32> to vector<8x128xf32>
    %122 = vector.extract_strided_slice %120 {offsets = [0, 0], sizes = [8, 96], strides = [1, 1]} : vector<8x128xf32> to vector<8x96xf32>
    %123 = arith.negf %122 : vector<8x96xf32>
    %124 = math.exp %123 : vector<8x96xf32>
    %cst_26 = arith.constant 1.000000e+00 : f32
    %125 = vector.broadcast %cst_26 : f32 to vector<8x96xf32>
    %126 = arith.addf %125, %124 : vector<8x96xf32>
    %127 = arith.divf %125, %126 : vector<8x96xf32>
    %128 = vector.extract_strided_slice %120 {offsets = [0, 96], sizes = [8, 32], strides = [1, 1]} : vector<8x128xf32> to vector<8x32xf32>
    %129 = math.tanh %128 : vector<8x32xf32>
    %130 = vector.extract_strided_slice %127 {offsets = [0, 0], sizes = [8, 32], strides = [1, 1]} : vector<8x96xf32> to vector<8x32xf32>
    %131 = vector.extract_strided_slice %127 {offsets = [0, 32], sizes = [8, 32], strides = [1, 1]} : vector<8x96xf32> to vector<8x32xf32>
    %132 = vector.extract_strided_slice %127 {offsets = [0, 64], sizes = [8, 32], strides = [1, 1]} : vector<8x96xf32> to vector<8x32xf32>
    %133 = arith.mulf %131, %95 : vector<8x32xf32>
    %134 = arith.mulf %130, %129 : vector<8x32xf32>
    %135 = arith.addf %133, %134 : vector<8x32xf32>
    %136 = math.tanh %135 : vector<8x32xf32>
    %137 = arith.mulf %132, %136 : vector<8x32xf32>
    %138 = vector.extract_strided_slice %13 {offsets = [3, 0, 0], sizes = [1, 8, 128], strides = [1, 1, 1]} : vector<8x8x128xf32> to vector<1x8x128xf32>
    %139 = vector.shape_cast %138 : vector<1x8x128xf32> to vector<8x128xf32>
    %140 = arith.addf %139, %121 : vector<8x128xf32>
    %141 = vector.extract_strided_slice %140 {offsets = [0, 0], sizes = [8, 96], strides = [1, 1]} : vector<8x128xf32> to vector<8x96xf32>
    %142 = arith.negf %141 : vector<8x96xf32>
    %143 = math.exp %142 : vector<8x96xf32>
    %cst_27 = arith.constant 1.000000e+00 : f32
    %144 = vector.broadcast %cst_27 : f32 to vector<8x96xf32>
    %145 = arith.addf %144, %143 : vector<8x96xf32>
    %146 = arith.divf %144, %145 : vector<8x96xf32>
    %147 = vector.extract_strided_slice %140 {offsets = [0, 96], sizes = [8, 32], strides = [1, 1]} : vector<8x128xf32> to vector<8x32xf32>
    %148 = math.tanh %147 : vector<8x32xf32>
    %149 = vector.extract_strided_slice %146 {offsets = [0, 0], sizes = [8, 32], strides = [1, 1]} : vector<8x96xf32> to vector<8x32xf32>
    %150 = vector.extract_strided_slice %146 {offsets = [0, 32], sizes = [8, 32], strides = [1, 1]} : vector<8x96xf32> to vector<8x32xf32>
    %151 = vector.extract_strided_slice %146 {offsets = [0, 64], sizes = [8, 32], strides = [1, 1]} : vector<8x96xf32> to vector<8x32xf32>
    %152 = arith.mulf %150, %114 : vector<8x32xf32>
    %153 = arith.mulf %149, %148 : vector<8x32xf32>
    %154 = arith.addf %152, %153 : vector<8x32xf32>
    %155 = math.tanh %154 : vector<8x32xf32>
    %156 = arith.mulf %151, %155 : vector<8x32xf32>
    %157 = tpu.concatenate %156, %137 in 1 : vector<8x32xf32>, vector<8x32xf32> -> vector<8x64xf32>
    %cst_28 = arith.constant dense<0.000000e+00> : vector<8x256xf32>
    %158 = tpu.matmul %157, %0, %cst_28 {dimension_numbers = #tpu.dot_dimension_numbers<[1], [0], [0], [1], [0, 0, 1, 1], [], []>} : vector<8x64xf32>, vector<64x256xf32>, vector<8x256xf32> -> vector<8x256xf32>
    %159 = vector.extract_strided_slice %158 {offsets = [0, 0], sizes = [8, 128], strides = [1, 1]} : vector<8x256xf32> to vector<8x128xf32>
    %160 = arith.addf %159, %3 : vector<8x128xf32>
    %161 = vector.extract_strided_slice %158 {offsets = [0, 128], sizes = [8, 128], strides = [1, 1]} : vector<8x256xf32> to vector<8x128xf32>
    %162 = vector.extract_strided_slice %160 {offsets = [0, 0], sizes = [8, 96], strides = [1, 1]} : vector<8x128xf32> to vector<8x96xf32>
    %163 = arith.negf %162 : vector<8x96xf32>
    %164 = math.exp %163 : vector<8x96xf32>
    %cst_29 = arith.constant 1.000000e+00 : f32
    %165 = vector.broadcast %cst_29 : f32 to vector<8x96xf32>
    %166 = arith.addf %165, %164 : vector<8x96xf32>
    %167 = arith.divf %165, %166 : vector<8x96xf32>
    %168 = vector.extract_strided_slice %160 {offsets = [0, 96], sizes = [8, 32], strides = [1, 1]} : vector<8x128xf32> to vector<8x32xf32>
    %169 = math.tanh %168 : vector<8x32xf32>
    %170 = vector.extract_strided_slice %167 {offsets = [0, 0], sizes = [8, 32], strides = [1, 1]} : vector<8x96xf32> to vector<8x32xf32>
    %171 = vector.extract_strided_slice %167 {offsets = [0, 32], sizes = [8, 32], strides = [1, 1]} : vector<8x96xf32> to vector<8x32xf32>
    %172 = vector.extract_strided_slice %167 {offsets = [0, 64], sizes = [8, 32], strides = [1, 1]} : vector<8x96xf32> to vector<8x32xf32>
    %173 = arith.mulf %171, %135 : vector<8x32xf32>
    %174 = arith.mulf %170, %169 : vector<8x32xf32>
    %175 = arith.addf %173, %174 : vector<8x32xf32>
    %176 = math.tanh %175 : vector<8x32xf32>
    %177 = arith.mulf %172, %176 : vector<8x32xf32>
    %178 = vector.extract_strided_slice %13 {offsets = [4, 0, 0], sizes = [1, 8, 128], strides = [1, 1, 1]} : vector<8x8x128xf32> to vector<1x8x128xf32>
    %179 = vector.shape_cast %178 : vector<1x8x128xf32> to vector<8x128xf32>
    %180 = arith.addf %179, %161 : vector<8x128xf32>
    %181 = vector.extract_strided_slice %180 {offsets = [0, 0], sizes = [8, 96], strides = [1, 1]} : vector<8x128xf32> to vector<8x96xf32>
    %182 = arith.negf %181 : vector<8x96xf32>
    %183 = math.exp %182 : vector<8x96xf32>
    %cst_30 = arith.constant 1.000000e+00 : f32
    %184 = vector.broadcast %cst_30 : f32 to vector<8x96xf32>
    %185 = arith.addf %184, %183 : vector<8x96xf32>
    %186 = arith.divf %184, %185 : vector<8x96xf32>
    %187 = vector.extract_strided_slice %180 {offsets = [0, 96], sizes = [8, 32], strides = [1, 1]} : vector<8x128xf32> to vector<8x32xf32>
    %188 = math.tanh %187 : vector<8x32xf32>
    %189 = vector.extract_strided_slice %186 {offsets = [0, 0], sizes = [8, 32], strides = [1, 1]} : vector<8x96xf32> to vector<8x32xf32>
    %190 = vector.extract_strided_slice %186 {offsets = [0, 32], sizes = [8, 32], strides = [1, 1]} : vector<8x96xf32> to vector<8x32xf32>
    %191 = vector.extract_strided_slice %186 {offsets = [0, 64], sizes = [8, 32], strides = [1, 1]} : vector<8x96xf32> to vector<8x32xf32>
    %192 = arith.mulf %190, %154 : vector<8x32xf32>
    %193 = arith.mulf %189, %188 : vector<8x32xf32>
    %194 = arith.addf %192, %193 : vector<8x32xf32>
    %195 = math.tanh %194 : vector<8x32xf32>
    %196 = arith.mulf %191, %195 : vector<8x32xf32>
    %197 = tpu.concatenate %196, %177 in 1 : vector<8x32xf32>, vector<8x32xf32> -> vector<8x64xf32>
    %cst_31 = arith.constant dense<0.000000e+00> : vector<8x256xf32>
    %198 = tpu.matmul %197, %0, %cst_31 {dimension_numbers = #tpu.dot_dimension_numbers<[1], [0], [0], [1], [0, 0, 1, 1], [], []>} : vector<8x64xf32>, vector<64x256xf32>, vector<8x256xf32> -> vector<8x256xf32>
    %199 = vector.extract_strided_slice %198 {offsets = [0, 0], sizes = [8, 128], strides = [1, 1]} : vector<8x256xf32> to vector<8x128xf32>
    %200 = arith.addf %199, %3 : vector<8x128xf32>
    %201 = vector.extract_strided_slice %198 {offsets = [0, 128], sizes = [8, 128], strides = [1, 1]} : vector<8x256xf32> to vector<8x128xf32>
    %202 = vector.extract_strided_slice %200 {offsets = [0, 0], sizes = [8, 96], strides = [1, 1]} : vector<8x128xf32> to vector<8x96xf32>
    %203 = arith.negf %202 : vector<8x96xf32>
    %204 = math.exp %203 : vector<8x96xf32>
    %cst_32 = arith.constant 1.000000e+00 : f32
    %205 = vector.broadcast %cst_32 : f32 to vector<8x96xf32>
    %206 = arith.addf %205, %204 : vector<8x96xf32>
    %207 = arith.divf %205, %206 : vector<8x96xf32>
    %208 = vector.extract_strided_slice %200 {offsets = [0, 96], sizes = [8, 32], strides = [1, 1]} : vector<8x128xf32> to vector<8x32xf32>
    %209 = math.tanh %208 : vector<8x32xf32>
    %210 = vector.extract_strided_slice %207 {offsets = [0, 0], sizes = [8, 32], strides = [1, 1]} : vector<8x96xf32> to vector<8x32xf32>
    %211 = vector.extract_strided_slice %207 {offsets = [0, 32], sizes = [8, 32], strides = [1, 1]} : vector<8x96xf32> to vector<8x32xf32>
    %212 = vector.extract_strided_slice %207 {offsets = [0, 64], sizes = [8, 32], strides = [1, 1]} : vector<8x96xf32> to vector<8x32xf32>
    %213 = arith.mulf %211, %175 : vector<8x32xf32>
    %214 = arith.mulf %210, %209 : vector<8x32xf32>
    %215 = arith.addf %213, %214 : vector<8x32xf32>
    %216 = math.tanh %215 : vector<8x32xf32>
    %217 = arith.mulf %212, %216 : vector<8x32xf32>
    %218 = vector.extract_strided_slice %13 {offsets = [5, 0, 0], sizes = [1, 8, 128], strides = [1, 1, 1]} : vector<8x8x128xf32> to vector<1x8x128xf32>
    %219 = vector.shape_cast %218 : vector<1x8x128xf32> to vector<8x128xf32>
    %220 = arith.addf %219, %201 : vector<8x128xf32>
    %221 = vector.extract_strided_slice %220 {offsets = [0, 0], sizes = [8, 96], strides = [1, 1]} : vector<8x128xf32> to vector<8x96xf32>
    %222 = arith.negf %221 : vector<8x96xf32>
    %223 = math.exp %222 : vector<8x96xf32>
    %cst_33 = arith.constant 1.000000e+00 : f32
    %224 = vector.broadcast %cst_33 : f32 to vector<8x96xf32>
    %225 = arith.addf %224, %223 : vector<8x96xf32>
    %226 = arith.divf %224, %225 : vector<8x96xf32>
    %227 = vector.extract_strided_slice %220 {offsets = [0, 96], sizes = [8, 32], strides = [1, 1]} : vector<8x128xf32> to vector<8x32xf32>
    %228 = math.tanh %227 : vector<8x32xf32>
    %229 = vector.extract_strided_slice %226 {offsets = [0, 0], sizes = [8, 32], strides = [1, 1]} : vector<8x96xf32> to vector<8x32xf32>
    %230 = vector.extract_strided_slice %226 {offsets = [0, 32], sizes = [8, 32], strides = [1, 1]} : vector<8x96xf32> to vector<8x32xf32>
    %231 = vector.extract_strided_slice %226 {offsets = [0, 64], sizes = [8, 32], strides = [1, 1]} : vector<8x96xf32> to vector<8x32xf32>
    %232 = arith.mulf %230, %194 : vector<8x32xf32>
    %233 = arith.mulf %229, %228 : vector<8x32xf32>
    %234 = arith.addf %232, %233 : vector<8x32xf32>
    %235 = math.tanh %234 : vector<8x32xf32>
    %236 = arith.mulf %231, %235 : vector<8x32xf32>
    %237 = tpu.concatenate %236, %217 in 1 : vector<8x32xf32>, vector<8x32xf32> -> vector<8x64xf32>
    %cst_34 = arith.constant dense<0.000000e+00> : vector<8x256xf32>
    %238 = tpu.matmul %237, %0, %cst_34 {dimension_numbers = #tpu.dot_dimension_numbers<[1], [0], [0], [1], [0, 0, 1, 1], [], []>} : vector<8x64xf32>, vector<64x256xf32>, vector<8x256xf32> -> vector<8x256xf32>
    %239 = vector.extract_strided_slice %238 {offsets = [0, 0], sizes = [8, 128], strides = [1, 1]} : vector<8x256xf32> to vector<8x128xf32>
    %240 = arith.addf %239, %3 : vector<8x128xf32>
    %241 = vector.extract_strided_slice %238 {offsets = [0, 128], sizes = [8, 128], strides = [1, 1]} : vector<8x256xf32> to vector<8x128xf32>
    %242 = vector.extract_strided_slice %240 {offsets = [0, 0], sizes = [8, 96], strides = [1, 1]} : vector<8x128xf32> to vector<8x96xf32>
    %243 = arith.negf %242 : vector<8x96xf32>
    %244 = math.exp %243 : vector<8x96xf32>
    %cst_35 = arith.constant 1.000000e+00 : f32
    %245 = vector.broadcast %cst_35 : f32 to vector<8x96xf32>
    %246 = arith.addf %245, %244 : vector<8x96xf32>
    %247 = arith.divf %245, %246 : vector<8x96xf32>
    %248 = vector.extract_strided_slice %240 {offsets = [0, 96], sizes = [8, 32], strides = [1, 1]} : vector<8x128xf32> to vector<8x32xf32>
    %249 = math.tanh %248 : vector<8x32xf32>
    %250 = vector.extract_strided_slice %247 {offsets = [0, 0], sizes = [8, 32], strides = [1, 1]} : vector<8x96xf32> to vector<8x32xf32>
    %251 = vector.extract_strided_slice %247 {offsets = [0, 32], sizes = [8, 32], strides = [1, 1]} : vector<8x96xf32> to vector<8x32xf32>
    %252 = vector.extract_strided_slice %247 {offsets = [0, 64], sizes = [8, 32], strides = [1, 1]} : vector<8x96xf32> to vector<8x32xf32>
    %253 = arith.mulf %251, %215 : vector<8x32xf32>
    %254 = arith.mulf %250, %249 : vector<8x32xf32>
    %255 = arith.addf %253, %254 : vector<8x32xf32>
    %256 = math.tanh %255 : vector<8x32xf32>
    %257 = arith.mulf %252, %256 : vector<8x32xf32>
    %258 = vector.extract_strided_slice %13 {offsets = [6, 0, 0], sizes = [1, 8, 128], strides = [1, 1, 1]} : vector<8x8x128xf32> to vector<1x8x128xf32>
    %259 = vector.shape_cast %258 : vector<1x8x128xf32> to vector<8x128xf32>
    %260 = arith.addf %259, %241 : vector<8x128xf32>
    %261 = vector.extract_strided_slice %260 {offsets = [0, 0], sizes = [8, 96], strides = [1, 1]} : vector<8x128xf32> to vector<8x96xf32>
    %262 = arith.negf %261 : vector<8x96xf32>
    %263 = math.exp %262 : vector<8x96xf32>
    %cst_36 = arith.constant 1.000000e+00 : f32
    %264 = vector.broadcast %cst_36 : f32 to vector<8x96xf32>
    %265 = arith.addf %264, %263 : vector<8x96xf32>
    %266 = arith.divf %264, %265 : vector<8x96xf32>
    %267 = vector.extract_strided_slice %260 {offsets = [0, 96], sizes = [8, 32], strides = [1, 1]} : vector<8x128xf32> to vector<8x32xf32>
    %268 = math.tanh %267 : vector<8x32xf32>
    %269 = vector.extract_strided_slice %266 {offsets = [0, 0], sizes = [8, 32], strides = [1, 1]} : vector<8x96xf32> to vector<8x32xf32>
    %270 = vector.extract_strided_slice %266 {offsets = [0, 32], sizes = [8, 32], strides = [1, 1]} : vector<8x96xf32> to vector<8x32xf32>
    %271 = vector.extract_strided_slice %266 {offsets = [0, 64], sizes = [8, 32], strides = [1, 1]} : vector<8x96xf32> to vector<8x32xf32>
    %272 = arith.mulf %270, %234 : vector<8x32xf32>
    %273 = arith.mulf %269, %268 : vector<8x32xf32>
    %274 = arith.addf %272, %273 : vector<8x32xf32>
    %275 = math.tanh %274 : vector<8x32xf32>
    %276 = arith.mulf %271, %275 : vector<8x32xf32>
    %277 = tpu.concatenate %276, %257 in 1 : vector<8x32xf32>, vector<8x32xf32> -> vector<8x64xf32>
    %cst_37 = arith.constant dense<0.000000e+00> : vector<8x256xf32>
    %278 = tpu.matmul %277, %0, %cst_37 {dimension_numbers = #tpu.dot_dimension_numbers<[1], [0], [0], [1], [0, 0, 1, 1], [], []>} : vector<8x64xf32>, vector<64x256xf32>, vector<8x256xf32> -> vector<8x256xf32>
    %279 = vector.extract_strided_slice %278 {offsets = [0, 0], sizes = [8, 128], strides = [1, 1]} : vector<8x256xf32> to vector<8x128xf32>
    %280 = arith.addf %279, %3 : vector<8x128xf32>
    %281 = vector.extract_strided_slice %278 {offsets = [0, 128], sizes = [8, 128], strides = [1, 1]} : vector<8x256xf32> to vector<8x128xf32>
    %282 = vector.extract_strided_slice %280 {offsets = [0, 0], sizes = [8, 96], strides = [1, 1]} : vector<8x128xf32> to vector<8x96xf32>
    %283 = arith.negf %282 : vector<8x96xf32>
    %284 = math.exp %283 : vector<8x96xf32>
    %cst_38 = arith.constant 1.000000e+00 : f32
    %285 = vector.broadcast %cst_38 : f32 to vector<8x96xf32>
    %286 = arith.addf %285, %284 : vector<8x96xf32>
    %287 = arith.divf %285, %286 : vector<8x96xf32>
    %288 = vector.extract_strided_slice %280 {offsets = [0, 96], sizes = [8, 32], strides = [1, 1]} : vector<8x128xf32> to vector<8x32xf32>
    %289 = math.tanh %288 : vector<8x32xf32>
    %290 = vector.extract_strided_slice %287 {offsets = [0, 0], sizes = [8, 32], strides = [1, 1]} : vector<8x96xf32> to vector<8x32xf32>
    %291 = vector.extract_strided_slice %287 {offsets = [0, 32], sizes = [8, 32], strides = [1, 1]} : vector<8x96xf32> to vector<8x32xf32>
    %292 = vector.extract_strided_slice %287 {offsets = [0, 64], sizes = [8, 32], strides = [1, 1]} : vector<8x96xf32> to vector<8x32xf32>
    %293 = arith.mulf %291, %255 : vector<8x32xf32>
    %294 = arith.mulf %290, %289 : vector<8x32xf32>
    %295 = arith.addf %293, %294 : vector<8x32xf32>
    %296 = math.tanh %295 : vector<8x32xf32>
    %297 = arith.mulf %292, %296 : vector<8x32xf32>
    %298 = vector.extract_strided_slice %13 {offsets = [7, 0, 0], sizes = [1, 8, 128], strides = [1, 1, 1]} : vector<8x8x128xf32> to vector<1x8x128xf32>
    %299 = vector.shape_cast %298 : vector<1x8x128xf32> to vector<8x128xf32>
    %300 = arith.addf %299, %281 : vector<8x128xf32>
    %301 = vector.extract_strided_slice %300 {offsets = [0, 0], sizes = [8, 96], strides = [1, 1]} : vector<8x128xf32> to vector<8x96xf32>
    %302 = arith.negf %301 : vector<8x96xf32>
    %303 = math.exp %302 : vector<8x96xf32>
    %cst_39 = arith.constant 1.000000e+00 : f32
    %304 = vector.broadcast %cst_39 : f32 to vector<8x96xf32>
    %305 = arith.addf %304, %303 : vector<8x96xf32>
    %306 = arith.divf %304, %305 : vector<8x96xf32>
    %307 = vector.extract_strided_slice %300 {offsets = [0, 96], sizes = [8, 32], strides = [1, 1]} : vector<8x128xf32> to vector<8x32xf32>
    %308 = math.tanh %307 : vector<8x32xf32>
    %309 = vector.extract_strided_slice %306 {offsets = [0, 0], sizes = [8, 32], strides = [1, 1]} : vector<8x96xf32> to vector<8x32xf32>
    %310 = vector.extract_strided_slice %306 {offsets = [0, 32], sizes = [8, 32], strides = [1, 1]} : vector<8x96xf32> to vector<8x32xf32>
    %311 = vector.extract_strided_slice %306 {offsets = [0, 64], sizes = [8, 32], strides = [1, 1]} : vector<8x96xf32> to vector<8x32xf32>
    %312 = arith.mulf %310, %274 : vector<8x32xf32>
    %313 = arith.mulf %309, %308 : vector<8x32xf32>
    %314 = arith.addf %312, %313 : vector<8x32xf32>
    %315 = math.tanh %314 : vector<8x32xf32>
    %316 = arith.mulf %311, %315 : vector<8x32xf32>
    %317 = tpu.concatenate %316, %297 in 1 : vector<8x32xf32>, vector<8x32xf32> -> vector<8x64xf32>
    %cst_40 = arith.constant dense<0.000000e+00> : vector<8x256xf32>
    %318 = tpu.matmul %317, %0, %cst_40 {dimension_numbers = #tpu.dot_dimension_numbers<[1], [0], [0], [1], [0, 0, 1, 1], [], []>} : vector<8x64xf32>, vector<64x256xf32>, vector<8x256xf32> -> vector<8x256xf32>
    %319 = vector.extract_strided_slice %318 {offsets = [0, 0], sizes = [8, 128], strides = [1, 1]} : vector<8x256xf32> to vector<8x128xf32>
    %320 = arith.addf %319, %3 : vector<8x128xf32>
    %321 = vector.extract_strided_slice %320 {offsets = [0, 0], sizes = [8, 96], strides = [1, 1]} : vector<8x128xf32> to vector<8x96xf32>
    %322 = arith.negf %321 : vector<8x96xf32>
    %323 = math.exp %322 : vector<8x96xf32>
    %cst_41 = arith.constant 1.000000e+00 : f32
    %324 = vector.broadcast %cst_41 : f32 to vector<8x96xf32>
    %325 = arith.addf %324, %323 : vector<8x96xf32>
    %326 = arith.divf %324, %325 : vector<8x96xf32>
    %327 = vector.extract_strided_slice %320 {offsets = [0, 96], sizes = [8, 32], strides = [1, 1]} : vector<8x128xf32> to vector<8x32xf32>
    %328 = math.tanh %327 : vector<8x32xf32>
    %329 = vector.extract_strided_slice %326 {offsets = [0, 0], sizes = [8, 32], strides = [1, 1]} : vector<8x96xf32> to vector<8x32xf32>
    %330 = vector.extract_strided_slice %326 {offsets = [0, 32], sizes = [8, 32], strides = [1, 1]} : vector<8x96xf32> to vector<8x32xf32>
    %331 = vector.extract_strided_slice %326 {offsets = [0, 64], sizes = [8, 32], strides = [1, 1]} : vector<8x96xf32> to vector<8x32xf32>
    %332 = arith.mulf %330, %295 : vector<8x32xf32>
    %333 = arith.mulf %329, %328 : vector<8x32xf32>
    %334 = arith.addf %332, %333 : vector<8x32xf32>
    %335 = math.tanh %334 : vector<8x32xf32>
    %336 = arith.mulf %331, %335 : vector<8x32xf32>
    %cst_42 = arith.constant dense<0.000000e+00> : vector<8x16xf32>
    %337 = tpu.matmul %336, %4, %cst_42 {dimension_numbers = #tpu.dot_dimension_numbers<[1], [0], [0], [1], [0, 0, 1, 1], [], []>} : vector<8x32xf32>, vector<32x16xf32>, vector<8x16xf32> -> vector<8x16xf32>
    %c0_43 = arith.constant 0 : index
    %c0_44 = arith.constant 0 : index
    %338 = vector.load %arg6[%c0_43, %c0_44] : memref<1x16xf32, #tpu.memory_space<vmem>>, vector<1x16xf32>
    %339 = vector.broadcast %338 : vector<1x16xf32> to vector<8x16xf32>
    %340 = arith.addf %337, %339 : vector<8x16xf32>
    %cst_45 = arith.constant 0.000000e+00 : f32
    %341 = vector.broadcast %cst_45 : f32 to vector<8x16xf32>
    %342 = arith.maximumf %340, %341 : vector<8x16xf32>
    %cst_46 = arith.constant dense<0.000000e+00> : vector<8x8xf32>
    %343 = tpu.matmul %342, %5, %cst_46 {dimension_numbers = #tpu.dot_dimension_numbers<[1], [0], [0], [1], [0, 0, 1, 1], [], []>} : vector<8x16xf32>, vector<16x8xf32>, vector<8x8xf32> -> vector<8x8xf32>
    %c0_47 = arith.constant 0 : index
    %c0_48 = arith.constant 0 : index
    %344 = vector.load %arg8[%c0_47, %c0_48] : memref<1x8xf32, #tpu.memory_space<vmem>>, vector<1x8xf32>
    %345 = vector.broadcast %344 : vector<1x8xf32> to vector<8x8xf32>
    %346 = arith.addf %343, %345 : vector<8x8xf32>
    %c0_49 = arith.constant 0 : index
    %c0_50 = arith.constant 0 : index
    %347 = vector.load %arg9[%c0_49, %c0_50] : memref<8x8xf32, #tpu.memory_space<vmem>>, vector<8x8xf32>
    tpu.vector_store %arg9[%c0_49, %c0_50], %346 {strides = array<i32>} : memref<8x8xf32, #tpu.memory_space<vmem>>, vector<8x8xf32>,
    return
  }
}

</mosaic_0001>

<llo_original>
// kernel: lstm_classifier_forward.1
$region0: #{lstm_classifier_forward.1}
  #allocation0 [shape = 'u32[]', space=smem, size = 0x4, offset = 0x4, fixed_abs, tag = 'smem constant byte address 0x4 - core index']
  #allocation1 [shape = 'u32[144,128]{1,0:T(1,128)}', space=vmem, size = 0x12000, scoped, tag = 'internal scratch']
  %s0 = inlined_call_operand.vmem [shape: f32[8,8,16], index: 0, kind: input, shape index: {}]
  %s1 = inlined_call_operand.vmem [shape: f32[16,128], index: 1, kind: input, shape index: {}]
  %s2 = inlined_call_operand.vmem [shape: f32[1,128], index: 2, kind: input, shape index: {}]
  %s3 = inlined_call_operand.vmem [shape: f32[64,256], index: 3, kind: input, shape index: {}]
  %s4 = inlined_call_operand.vmem [shape: f32[1,128], index: 4, kind: input, shape index: {}]
  %s5 = inlined_call_operand.vmem [shape: f32[32,16], index: 5, kind: input, shape index: {}]
  %s6 = inlined_call_operand.vmem [shape: f32[1,16], index: 6, kind: input, shape index: {}]
  %s7 = inlined_call_operand.vmem [shape: f32[16,8], index: 7, kind: input, shape index: {}]
  %s8 = inlined_call_operand.vmem [shape: f32[1,8], index: 8, kind: input, shape index: {}]
  %s9 = inlined_call_operand.vmem [shape: f32[8,8], index: 9, kind: output, shape index: {}]
  %s10 = sld [smem:[#allocation0]]
  $region46: #{lstm_classifier_forward.1} parent=0
    _
  %s12 = ssub.s32 1, %s10
  %s13 = scalar_select 0, %s12, %s10
  // Predicated region
  $region2: #{lstm_classifier_forward.1} parent=0 // pred_check
    _
  $region3: #{lstm_classifier_forward.1} parent=0 // pred_check_branch
    %15 = sbr.rel (0) target = $region5
  $region4: #{lstm_classifier_forward.1} parent=0 // pred_region
    _
  $region5: #{lstm_classifier_forward.1} parent=0 // pred_fallthru
    _
  // Predicated region
  $region6: #{lstm_classifier_forward.1} parent=0 // pred_check
    _
  $region7: #{lstm_classifier_forward.1} parent=0 // pred_check_branch
    %17 = sbr.rel (0) target = $region9
  $region8: #{lstm_classifier_forward.1} parent=0 // pred_region
    _
  $region9: #{lstm_classifier_forward.1} parent=0 // pred_fallthru
    _
  // Predicated region
  $region10: #{lstm_classifier_forward.1} parent=0 // pred_check
    _
  $region11: #{lstm_classifier_forward.1} parent=0 // pred_check_branch
    %19 = sbr.rel (0) target = $region13
  $region12: #{lstm_classifier_forward.1} parent=0 // pred_region
    _
  $region13: #{lstm_classifier_forward.1} parent=0 // pred_fallthru
    _
  // Predicated region
  $region14: #{lstm_classifier_forward.1} parent=0 // pred_check
    _
  $region15: #{lstm_classifier_forward.1} parent=0 // pred_check_branch
    %21 = sbr.rel (0) target = $region17
  $region16: #{lstm_classifier_forward.1} parent=0 // pred_region
    _
  $region17: #{lstm_classifier_forward.1} parent=0 // pred_fallthru
    _
  // Predicated region
  $region18: #{lstm_classifier_forward.1} parent=0 // pred_check
    _
  $region19: #{lstm_classifier_forward.1} parent=0 // pred_check_branch
    %23 = sbr.rel (0) target = $region21
  $region20: #{lstm_classifier_forward.1} parent=0 // pred_region
    _
  $region21: #{lstm_classifier_forward.1} parent=0 // pred_fallthru
    _
  // Predicated region
  $region22: #{lstm_classifier_forward.1} parent=0 // pred_check
    _
  $region23: #{lstm_classifier_forward.1} parent=0 // pred_check_branch
    %25 = sbr.rel (0) target = $region25
  $region24: #{lstm_classifier_forward.1} parent=0 // pred_region
    _
  $region25: #{lstm_classifier_forward.1} parent=0 // pred_fallthru
    _
  // Predicated region
  $region26: #{lstm_classifier_forward.1} parent=0 // pred_check
    _
  $region27: #{lstm_classifier_forward.1} parent=0 // pred_check_branch
    %27 = sbr.rel (0) target = $region29
  $region28: #{lstm_classifier_forward.1} parent=0 // pred_region
    _
  $region29: #{lstm_classifier_forward.1} parent=0 // pred_fallthru
    _
  // Predicated region
  $region30: #{lstm_classifier_forward.1} parent=0 // pred_check
    _
  $region31: #{lstm_classifier_forward.1} parent=0 // pred_check_branch
    %29 = sbr.rel (0) target = $region33
  $region32: #{lstm_classifier_forward.1} parent=0 // pred_region
    _
  $region33: #{lstm_classifier_forward.1} parent=0 // pred_fallthru
    _
  // Predicated region
  $region34: #{lstm_classifier_forward.1} parent=0 // pred_check
    _
  $region35: #{lstm_classifier_forward.1} parent=0 // pred_check_branch
    %31 = sbr.rel (0) target = $region37
  $region36: #{lstm_classifier_forward.1} parent=0 // pred_region
    _
  $region37: #{lstm_classifier_forward.1} parent=0 // pred_fallthru
    _
  %v32 = vld [vmem:[%s3] sm:$0xff]
  %v33 = vld [vmem:[%s3 + $0x8] sm:$0xff]
  %v34 = vld [vmem:[%s3 + $0x10] sm:$0xff]
  %v35 = vld [vmem:[%s3 + $0x18] sm:$0xff]
  %v36 = vld [vmem:[%s3 + $0x20] sm:$0xff]
  %v37 = vld [vmem:[%s3 + $0x28] sm:$0xff]
  %v38 = vld [vmem:[%s3 + $0x30] sm:$0xff]
  %v39 = vld [vmem:[%s3 + $0x38] sm:$0xff]
  %v40 = vld [vmem:[%s3 + $0x40] sm:$0xff]
  %v41 = vld [vmem:[%s3 + $0x48] sm:$0xff]
  %v42 = vld [vmem:[%s3 + $0x50] sm:$0xff]
  %v43 = vld [vmem:[%s3 + $0x58] sm:$0xff]
  %v44 = vld [vmem:[%s3 + $0x60] sm:$0xff]
  %v45 = vld [vmem:[%s3 + $0x68] sm:$0xff]
  %v46 = vld [vmem:[%s3 + $0x70] sm:$0xff]
  %v47 = vld [vmem:[%s3 + $0x78] sm:$0xff]
  %v48 = vld [vmem:[%s4] sm:$0x1]
  %v50 = vlaneseq
  %v51 = vshrl.u32 %v50, 7
  %v52 = vsub.s32 0, %v51
  %v53 = vrot.slane %v48, %v52
  %v55 = vld [vmem:[%s5] sm:$0xff]
  %v56 = vld [vmem:[%s5 + $0x8] sm:$0xff]
  %v57 = vld [vmem:[%s5 + $0x10] sm:$0xff]
  %v58 = vld [vmem:[%s5 + $0x18] sm:$0xff]
  %v59 = vld [vmem:[%s7] sm:$0xff]
  %v60 = vld [vmem:[%s7 + $0x8] sm:$0xff]
  %v61 = vld [vmem:[%s0] sm:$0xff]
  %v62 = vld [vmem:[%s0 + $0x8] sm:$0xff]
  %v63 = vld [vmem:[%s0 + $0x10] sm:$0xff]
  %v64 = vld [vmem:[%s0 + $0x18] sm:$0xff]
  %v65 = vld [vmem:[%s0 + $0x20] sm:$0xff]
  %v66 = vld [vmem:[%s0 + $0x28] sm:$0xff]
  %v67 = vld [vmem:[%s0 + $0x30] sm:$0xff]
  %v68 = vld [vmem:[%s0 + $0x38] sm:$0xff]
  %v69 = vld [vmem:[%s1] sm:$0xff]
  %v70 = vld [vmem:[%s1 + $0x8] sm:$0xff]
  %v71 = vld [vmem:[%s2] sm:$0x1]
  %v73 = vlaneseq
  %v74 = vshrl.u32 %v73, 7
  %v75 = vsub.s32 0, %v74
  %v76 = vrot.slane %v71, %v75
  %vm78 = vcmask 130048
  %v80 = vsel %vm78, %v61, 0
  %v83 = vsel %vm78, %v62, 0
  %v86 = vsel %vm78, %v63, 0
  %v89 = vsel %vm78, %v64, 0
  %v92 = vsel %vm78, %v65, 0
  %v95 = vsel %vm78, %v66, 0
  %v98 = vsel %vm78, %v67, 0
  %v101 = vsel %vm78, %v68, 0
  %103 = vmatprep.subr.mxu0 0.0
  %104 = vmatpush1.msra.mxu0 0.0
  %105 = vmatprep.subr.mxu0 0.0
  %106 = vmatpush1.msra.mxu0 0.0
  %107 = vmatprep.subr.mxu0 0.0
  %108 = vmatpush1.msra.mxu0 0.0
  %109 = vmatprep.subr.mxu0 0.0
  %110 = vmatpush1.msra.mxu0 0.0
  %111 = vmatprep.subr.mxu0 0.0
  %112 = vmatpush1.msra.mxu0 0.0
  %113 = vmatprep.subr.mxu0 0.0
  %114 = vmatpush1.msra.mxu0 0.0
  %115 = vmatprep.subr.mxu0 0.0
  %116 = vmatpush1.msra.mxu0 0.0
  %117 = vmatprep.subr.mxu0 0.0
  %118 = vmatpush1.msra.mxu0 0.0
  %119 = vmatprep.subr.mxu0 0.0
  %120 = vmatpush1.msra.mxu0 0.0
  %121 = vmatprep.subr.mxu0 0.0
  %122 = vmatpush1.msra.mxu0 0.0
  %123 = vmatprep.subr.mxu0 0.0
  %124 = vmatpush1.msra.mxu0 0.0
  %125 = vmatprep.subr.mxu0 0.0
  %126 = vmatpush1.msra.mxu0 0.0
  %127 = vmatprep.subr.mxu0 0.0
  %128 = vmatpush1.msra.mxu0 0.0
  %129 = vmatprep.subr.mxu0 0.0
  %130 = vmatpush1.msra.mxu0 0.0
  %131 = vmatprep.subr.mxu0 0.0
  %132 = vmatpush1.msra.mxu0 %v70
  %133 = vmatprep.subr.mxu0 0.0
  %134 = vmatpush1.msra.mxu0 %v69
  %135 = vmatprep.subr.mxu0 0.0
  %136 = vmatpush2.msra.mxu0 0.0
  %137 = vmatprep.subr.mxu0 0.0
  %138 = vmatpush2.msra.mxu0 0.0
  %139 = vmatprep.subr.mxu0 0.0
  %140 = vmatpush2.msra.mxu0 0.0
  %141 = vmatprep.subr.mxu0 0.0
  %142 = vmatpush2.msra.mxu0 0.0
  %143 = vmatprep.subr.mxu0 0.0
  %144 = vmatpush2.msra.mxu0 0.0
  %145 = vmatprep.subr.mxu0 0.0
  %146 = vmatpush2.msra.mxu0 0.0
  %147 = vmatprep.subr.mxu0 0.0
  %148 = vmatpush2.msra.mxu0 0.0
  %149 = vmatprep.subr.mxu0 0.0
  %150 = vmatpush2.msra.mxu0 0.0
  %151 = vmatprep.subr.mxu0 0.0
  %152 = vmatpush2.msra.mxu0 0.0
  %153 = vmatprep.subr.mxu0 0.0
  %154 = vmatpush2.msra.mxu0 0.0
  %155 = vmatprep.subr.mxu0 0.0
  %156 = vmatpush2.msra.mxu0 0.0
  %157 = vmatprep.subr.mxu0 0.0
  %158 = vmatpush2.msra.mxu0 0.0
  %159 = vmatprep.subr.mxu0 0.0
  %160 = vmatpush2.msra.mxu0 0.0
  %161 = vmatprep.subr.mxu0 0.0
  %162 = vmatpush2.msra.mxu0 0.0
  %163 = vmatprep.subr.mxu0 0.0
  %164 = vmatpush2.msra.mxu0 0.0
  %165 = vmatprep.subr.mxu0 0.0
  %166 = vmatpush2.msra.mxu0 0.0
  %167 = vmatprep.mubr.f32.mxu0 0.0
  %168 = vmatmul.mubr.f32.gmra.mxu0 %v80
  %v169 = vpop.f32.mrf.mxu0
  %v170 = vadd.f32 %v76, %v169
  %v171 = vpop.f32.mrf.mxu0
  %172 = vmatprep.mubr.f32.mxu0 0.0
  %173 = vmatmul.mubr.f32.gmra.mxu0 %v83
  %v174 = vpop.f32.mrf.mxu0
  %v175 = vadd.f32 %v76, %v174
  %v176 = vpop.f32.mrf.mxu0
  %177 = vmatprep.mubr.f32.mxu0 0.0
  %178 = vmatmul.mubr.f32.gmra.mxu0 %v86
  %v179 = vpop.f32.mrf.mxu0
  %v180 = vadd.f32 %v76, %v179
  %v181 = vpop.f32.mrf.mxu0
  %182 = vmatprep.mubr.f32.mxu0 0.0
  %183 = vmatmul.mubr.f32.gmra.mxu0 %v89
  %v184 = vpop.f32.mrf.mxu0
  %v185 = vadd.f32 %v76, %v184
  %v186 = vpop.f32.mrf.mxu0
  %187 = vmatprep.mubr.f32.mxu0 0.0
  %188 = vmatmul.mubr.f32.gmra.mxu0 %v92
  %v189 = vpop.f32.mrf.mxu0
  %v190 = vadd.f32 %v76, %v189
  %v191 = vpop.f32.mrf.mxu0
  %192 = vmatprep.mubr.f32.mxu0 0.0
  %193 = vmatmul.mubr.f32.gmra.mxu0 %v95
  %v194 = vpop.f32.mrf.mxu0
  %v195 = vadd.f32 %v76, %v194
  %v196 = vpop.f32.mrf.mxu0
  %197 = vmatprep.mubr.f32.mxu0 0.0
  %198 = vmatmul.mubr.f32.gmra.mxu0 %v98
  %v199 = vpop.f32.mrf.mxu0
  %v200 = vadd.f32 %v76, %v199
  %v201 = vpop.f32.mrf.mxu0
  %202 = vmatprep.mubr.f32.mxu0 0.0
  %203 = vmatmul.mubr.f32.gmra.mxu0 %v101
  %v204 = vpop.f32.mrf.mxu0
  %v205 = vadd.f32 %v76, %v204
  %v206 = vpop.f32.mrf.mxu0
  %207 = vdwg.mxu0
  %v208 = vadd.f32 %v170, 0.0
  %v209 = vxor.u32 %v208, 2147483648
  %v210 = vmul.f32 %v209, 1.442695
  %v211 = vpow.pop %v210
  %v212 = vadd.f32 %v211, 1.0
  %v213 = vrcp.pop %v212
  %v214 = vmul.f32 1.0, %v213
  %v215 = vtanh.pop %v208
  %v216 = vmul.f32 %v214, 0.0
  %218 = vrot.lane.b32.xlu0 %v215, 32
  %v219 = vpop.permute.xlu0 %218
  %v221 = vmul.f32 %v214, %v219
  %223 = vrot.lane.b32.xlu0 %v221, 32
  %v224 = vpop.permute.xlu0 %223
  %v226 = vadd.f32 %v216, %v224
  %v227 = vtanh.pop %v226
  %229 = vrot.lane.b32.xlu0 %v227, 32
  %v230 = vpop.permute.xlu0 %229
  %v232 = vmul.f32 %v214, %v230
  %234 = vrot.lane.b32.xlu0 %v232, 64
  %v235 = vpop.permute.xlu0 %234
  %vm237 = vcmask 261120
  %v238 = vsel %vm237, %v235, 0.0
  %vm239 = vcmask 523264
  %v241 = vsel %vm239, %v238, 0
  %243 = vmatprep.subr.mxu0 0.0
  %244 = vmatpush1.msra.mxu0 0.0
  %245 = vmatprep.subr.mxu0 0.0
  %246 = vmatpush1.msra.mxu0 0.0
  %247 = vmatprep.subr.mxu0 0.0
  %248 = vmatpush1.msra.mxu0 0.0
  %249 = vmatprep.subr.mxu0 0.0
  %250 = vmatpush1.msra.mxu0 0.0
  %251 = vmatprep.subr.mxu0 0.0
  %252 = vmatpush1.msra.mxu0 0.0
  %253 = vmatprep.subr.mxu0 0.0
  %254 = vmatpush1.msra.mxu0 0.0
  %255 = vmatprep.subr.mxu0 0.0
  %256 = vmatpush1.msra.mxu0 0.0
  %257 = vmatprep.subr.mxu0 0.0
  %258 = vmatpush1.msra.mxu0 0.0
  %259 = vmatprep.subr.mxu0 %v47
  %260 = vmatpush1.msra.mxu0 %v46
  %261 = vmatprep.subr.mxu0 %v45
  %262 = vmatpush1.msra.mxu0 %v44
  %263 = vmatprep.subr.mxu0 %v43
  %264 = vmatpush1.msra.mxu0 %v42
  %265 = vmatprep.subr.mxu0 %v41
  %266 = vmatpush1.msra.mxu0 %v40
  %267 = vmatprep.subr.mxu0 %v39
  %268 = vmatpush1.msra.mxu0 %v38
  %269 = vmatprep.subr.mxu0 %v37
  %270 = vmatpush1.msra.mxu0 %v36
  %271 = vmatprep.subr.mxu0 %v35
  %272 = vmatpush1.msra.mxu0 %v34
  %273 = vmatprep.subr.mxu0 %v33
  %274 = vmatpush1.msra.mxu0 %v32
  %275 = vmatprep.subr.mxu0 0.0
  %276 = vmatpush2.msra.mxu0 0.0
  %277 = vmatprep.subr.mxu0 0.0
  %278 = vmatpush2.msra.mxu0 0.0
  %279 = vmatprep.subr.mxu0 0.0
  %280 = vmatpush2.msra.mxu0 0.0
  %281 = vmatprep.subr.mxu0 0.0
  %282 = vmatpush2.msra.mxu0 0.0
  %283 = vmatprep.subr.mxu0 0.0
  %284 = vmatpush2.msra.mxu0 0.0
  %285 = vmatprep.subr.mxu0 0.0
  %286 = vmatpush2.msra.mxu0 0.0
  %287 = vmatprep.subr.mxu0 0.0
  %288 = vmatpush2.msra.mxu0 0.0
  %289 = vmatprep.subr.mxu0 0.0
  %290 = vmatpush2.msra.mxu0 0.0
  %291 = vmatprep.subr.mxu0 0.0
  %292 = vmatpush2.msra.mxu0 0.0
  %293 = vmatprep.subr.mxu0 0.0
  %294 = vmatpush2.msra.mxu0 0.0
  %295 = vmatprep.subr.mxu0 0.0
  %296 = vmatpush2.msra.mxu0 0.0
  %297 = vmatprep.subr.mxu0 0.0
  %298 = vmatpush2.msra.mxu0 0.0
  %299 = vmatprep.subr.mxu0 0.0
  %300 = vmatpush2.msra.mxu0 0.0
  %301 = vmatprep.subr.mxu0 0.0
  %302 = vmatpush2.msra.mxu0 0.0
  %303 = vmatprep.subr.mxu0 0.0
  %304 = vmatpush2.msra.mxu0 0.0
  %305 = vmatprep.subr.mxu0 0.0
  %306 = vmatpush2.msra.mxu0 0.0
  %307 = vmatprep.mubr.f32.mxu0 0.0
  %308 = vmatmul.mubr.f32.gmra.mxu0 %v241
  %v309 = vpop.f32.mrf.mxu0
  %v310 = vadd.f32 0.0, %v309
  %v311 = vpop.f32.mrf.mxu0
  %v312 = vadd.f32 0.0, %v311
  %313 = vdwg.mxu0
  %v314 = vadd.f32 %v310, %v53
  %v315 = vxor.u32 %v314, 2147483648
  %v316 = vmul.f32 %v315, 1.442695
  %v317 = vpow.pop %v316
  %v318 = vadd.f32 %v317, 1.0
  %v319 = vrcp.pop %v318
  %v320 = vmul.f32 1.0, %v319
  %v321 = vtanh.pop %v314
  %v322 = vmul.f32 %v320, 0.0
  %324 = vrot.lane.b32.xlu0 %v321, 32
  %v325 = vpop.permute.xlu0 %324
  %v327 = vmul.f32 %v320, %v325
  %329 = vrot.lane.b32.xlu0 %v327, 32
  %v330 = vpop.permute.xlu0 %329
  %v332 = vadd.f32 %v322, %v330
  %v333 = vtanh.pop %v332
  %335 = vrot.lane.b32.xlu0 %v333, 32
  %v336 = vpop.permute.xlu0 %335
  %v338 = vmul.f32 %v320, %v336
  %v339 = vadd.f32 %v175, %v312
  %v340 = vxor.u32 %v339, 2147483648
  %v341 = vmul.f32 %v340, 1.442695
  %v342 = vpow.pop %v341
  %v343 = vadd.f32 %v342, 1.0
  %v344 = vrcp.pop %v343
  %v345 = vmul.f32 1.0, %v344
  %v346 = vtanh.pop %v339
  %v347 = vmul.f32 %v345, %v226
  %349 = vrot.lane.b32.xlu0 %v346, 32
  %v350 = vpop.permute.xlu0 %349
  %v352 = vmul.f32 %v345, %v350
  %354 = vrot.lane.b32.xlu0 %v352, 32
  %v355 = vpop.permute.xlu0 %354
  %v357 = vadd.f32 %v347, %v355
  %v358 = vtanh.pop %v357
  %360 = vrot.lane.b32.xlu0 %v358, 32
  %v361 = vpop.permute.xlu0 %360
  %v363 = vmul.f32 %v345, %v361
  %365 = vrot.lane.b32.xlu0 %v363, 64
  %v366 = vpop.permute.xlu0 %365
  %369 = vrot.lane.b32.xlu0 %v338, 96
  %v370 = vpop.permute.xlu0 %369
  %v372 = vsel %vm237, %v366, %v370
  %v374 = vsel %vm239, %v372, 0
  %376 = vmatprep.subr.mxu0 0.0
  %377 = vmatpush1.msra.mxu0 0.0
  %378 = vmatprep.subr.mxu0 0.0
  %379 = vmatpush1.msra.mxu0 0.0
  %380 = vmatprep.subr.mxu0 0.0
  %381 = vmatpush1.msra.mxu0 0.0
  %382 = vmatprep.subr.mxu0 0.0
  %383 = vmatpush1.msra.mxu0 0.0
  %384 = vmatprep.subr.mxu0 0.0
  %385 = vmatpush1.msra.mxu0 0.0
  %386 = vmatprep.subr.mxu0 0.0
  %387 = vmatpush1.msra.mxu0 0.0
  %388 = vmatprep.subr.mxu0 0.0
  %389 = vmatpush1.msra.mxu0 0.0
  %390 = vmatprep.subr.mxu0 0.0
  %391 = vmatpush1.msra.mxu0 0.0
  %392 = vmatprep.subr.mxu0 %v47
  %393 = vmatpush1.msra.mxu0 %v46
  %394 = vmatprep.subr.mxu0 %v45
  %395 = vmatpush1.msra.mxu0 %v44
  %396 = vmatprep.subr.mxu0 %v43
  %397 = vmatpush1.msra.mxu0 %v42
  %398 = vmatprep.subr.mxu0 %v41
  %399 = vmatpush1.msra.mxu0 %v40
  %400 = vmatprep.subr.mxu0 %v39
  %401 = vmatpush1.msra.mxu0 %v38
  %402 = vmatprep.subr.mxu0 %v37
  %403 = vmatpush1.msra.mxu0 %v36
  %404 = vmatprep.subr.mxu0 %v35
  %405 = vmatpush1.msra.mxu0 %v34
  %406 = vmatprep.subr.mxu0 %v33
  %407 = vmatpush1.msra.mxu0 %v32
  %408 = vmatprep.subr.mxu0 0.0
  %409 = vmatpush2.msra.mxu0 0.0
  %410 = vmatprep.subr.mxu0 0.0
  %411 = vmatpush2.msra.mxu0 0.0
  %412 = vmatprep.subr.mxu0 0.0
  %413 = vmatpush2.msra.mxu0 0.0
  %414 = vmatprep.subr.mxu0 0.0
  %415 = vmatpush2.msra.mxu0 0.0
  %416 = vmatprep.subr.mxu0 0.0
  %417 = vmatpush2.msra.mxu0 0.0
  %418 = vmatprep.subr.mxu0 0.0
  %419 = vmatpush2.msra.mxu0 0.0
  %420 = vmatprep.subr.mxu0 0.0
  %421 = vmatpush2.msra.mxu0 0.0
  %422 = vmatprep.subr.mxu0 0.0
  %423 = vmatpush2.msra.mxu0 0.0
  %424 = vmatprep.subr.mxu0 0.0
  %425 = vmatpush2.msra.mxu0 0.0
  %426 = vmatprep.subr.mxu0 0.0
  %427 = vmatpush2.msra.mxu0 0.0
  %428 = vmatprep.subr.mxu0 0.0
  %429 = vmatpush2.msra.mxu0 0.0
  %430 = vmatprep.subr.mxu0 0.0
  %431 = vmatpush2.msra.mxu0 0.0
  %432 = vmatprep.subr.mxu0 0.0
  %433 = vmatpush2.msra.mxu0 0.0
  %434 = vmatprep.subr.mxu0 0.0
  %435 = vmatpush2.msra.mxu0 0.0
  %436 = vmatprep.subr.mxu0 0.0
  %437 = vmatpush2.msra.mxu0 0.0
  %438 = vmatprep.subr.mxu0 0.0
  %439 = vmatpush2.msra.mxu0 0.0
  %440 = vmatprep.mubr.f32.mxu0 0.0
  %441 = vmatmul.mubr.f32.gmra.mxu0 %v374
  %v442 = vpop.f32.mrf.mxu0
  %v443 = vadd.f32 0.0, %v442
  %v444 = vpop.f32.mrf.mxu0
  %v445 = vadd.f32 0.0, %v444
  %446 = vdwg.mxu0
  %v447 = vadd.f32 %v443, %v53
  %v448 = vxor.u32 %v447, 2147483648
  %v449 = vmul.f32 %v448, 1.442695
  %v450 = vpow.pop %v449
  %v451 = vadd.f32 %v450, 1.0
  %v452 = vrcp.pop %v451
  %v453 = vmul.f32 1.0, %v452
  %v454 = vtanh.pop %v447
  %v455 = vmul.f32 %v453, %v332
  %457 = vrot.lane.b32.xlu0 %v454, 32
  %v458 = vpop.permute.xlu0 %457
  %v460 = vmul.f32 %v453, %v458
  %462 = vrot.lane.b32.xlu0 %v460, 32
  %v463 = vpop.permute.xlu0 %462
  %v465 = vadd.f32 %v455, %v463
  %v466 = vtanh.pop %v465
  %468 = vrot.lane.b32.xlu0 %v466, 32
  %v469 = vpop.permute.xlu0 %468
  %v471 = vmul.f32 %v453, %v469
  %v472 = vadd.f32 %v180, %v445
  %v473 = vxor.u32 %v472, 2147483648
  %v474 = vmul.f32 %v473, 1.442695
  %v475 = vpow.pop %v474
  %v476 = vadd.f32 %v475, 1.0
  %v477 = vrcp.pop %v476
  %v478 = vmul.f32 1.0, %v477
  %v479 = vtanh.pop %v472
  %v480 = vmul.f32 %v478, %v357
  %482 = vrot.lane.b32.xlu0 %v479, 32
  %v483 = vpop.permute.xlu0 %482
  %v485 = vmul.f32 %v478, %v483
  %487 = vrot.lane.b32.xlu0 %v485, 32
  %v488 = vpop.permute.xlu0 %487
  %v490 = vadd.f32 %v480, %v488
  %v491 = vtanh.pop %v490
  %493 = vrot.lane.b32.xlu0 %v491, 32
  %v494 = vpop.permute.xlu0 %493
  %v496 = vmul.f32 %v478, %v494
  %498 = vrot.lane.b32.xlu0 %v496, 64
  %v499 = vpop.permute.xlu0 %498
  %502 = vrot.lane.b32.xlu0 %v471, 96
  %v503 = vpop.permute.xlu0 %502
  %v505 = vsel %vm237, %v499, %v503
  %v507 = vsel %vm239, %v505, 0
  %509 = vmatprep.subr.mxu0 0.0
  %510 = vmatpush1.msra.mxu0 0.0
  %511 = vmatprep.subr.mxu0 0.0
  %512 = vmatpush1.msra.mxu0 0.0
  %513 = vmatprep.subr.mxu0 0.0
  %514 = vmatpush1.msra.mxu0 0.0
  %515 = vmatprep.subr.mxu0 0.0
  %516 = vmatpush1.msra.mxu0 0.0
  %517 = vmatprep.subr.mxu0 0.0
  %518 = vmatpush1.msra.mxu0 0.0
  %519 = vmatprep.subr.mxu0 0.0
  %520 = vmatpush1.msra.mxu0 0.0
  %521 = vmatprep.subr.mxu0 0.0
  %522 = vmatpush1.msra.mxu0 0.0
  %523 = vmatprep.subr.mxu0 0.0
  %524 = vmatpush1.msra.mxu0 0.0
  %525 = vmatprep.subr.mxu0 %v47
  %526 = vmatpush1.msra.mxu0 %v46
  %527 = vmatprep.subr.mxu0 %v45
  %528 = vmatpush1.msra.mxu0 %v44
  %529 = vmatprep.subr.mxu0 %v43
  %530 = vmatpush1.msra.mxu0 %v42
  %531 = vmatprep.subr.mxu0 %v41
  %532 = vmatpush1.msra.mxu0 %v40
  %533 = vmatprep.subr.mxu0 %v39
  %534 = vmatpush1.msra.mxu0 %v38
  %535 = vmatprep.subr.mxu0 %v37
  %536 = vmatpush1.msra.mxu0 %v36
  %537 = vmatprep.subr.mxu0 %v35
  %538 = vmatpush1.msra.mxu0 %v34
  %539 = vmatprep.subr.mxu0 %v33
  %540 = vmatpush1.msra.mxu0 %v32
  %541 = vmatprep.subr.mxu0 0.0
  %542 = vmatpush2.msra.mxu0 0.0
  %543 = vmatprep.subr.mxu0 0.0
  %544 = vmatpush2.msra.mxu0 0.0
  %545 = vmatprep.subr.mxu0 0.0
  %546 = vmatpush2.msra.mxu0 0.0
  %547 = vmatprep.subr.mxu0 0.0
  %548 = vmatpush2.msra.mxu0 0.0
  %549 = vmatprep.subr.mxu0 0.0
  %550 = vmatpush2.msra.mxu0 0.0
  %551 = vmatprep.subr.mxu0 0.0
  %552 = vmatpush2.msra.mxu0 0.0
  %553 = vmatprep.subr.mxu0 0.0
  %554 = vmatpush2.msra.mxu0 0.0
  %555 = vmatprep.subr.mxu0 0.0
  %556 = vmatpush2.msra.mxu0 0.0
  %557 = vmatprep.subr.mxu0 0.0
  %558 = vmatpush2.msra.mxu0 0.0
  %559 = vmatprep.subr.mxu0 0.0
  %560 = vmatpush2.msra.mxu0 0.0
  %561 = vmatprep.subr.mxu0 0.0
  %562 = vmatpush2.msra.mxu0 0.0
  %563 = vmatprep.subr.mxu0 0.0
  %564 = vmatpush2.msra.mxu0 0.0
  %565 = vmatprep.subr.mxu0 0.0
  %566 = vmatpush2.msra.mxu0 0.0
  %567 = vmatprep.subr.mxu0 0.0
  %568 = vmatpush2.msra.mxu0 0.0
  %569 = vmatprep.subr.mxu0 0.0
  %570 = vmatpush2.msra.mxu0 0.0
  %571 = vmatprep.subr.mxu0 0.0
  %572 = vmatpush2.msra.mxu0 0.0
  %573 = vmatprep.mubr.f32.mxu0 0.0
  %574 = vmatmul.mubr.f32.gmra.mxu0 %v507
  %v575 = vpop.f32.mrf.mxu0
  %v576 = vadd.f32 0.0, %v575
  %v577 = vpop.f32.mrf.mxu0
  %v578 = vadd.f32 0.0, %v577
  %579 = vdwg.mxu0
  %v580 = vadd.f32 %v576, %v53
  %v581 = vxor.u32 %v580, 2147483648
  %v582 = vmul.f32 %v581, 1.442695
  %v583 = vpow.pop %v582
  %v584 = vadd.f32 %v583, 1.0
  %v585 = vrcp.pop %v584
  %v586 = vmul.f32 1.0, %v585
  %v587 = vtanh.pop %v580
  %v588 = vmul.f32 %v586, %v465
  %590 = vrot.lane.b32.xlu0 %v587, 32
  %v591 = vpop.permute.xlu0 %590
  %v593 = vmul.f32 %v586, %v591
  %595 = vrot.lane.b32.xlu0 %v593, 32
  %v596 = vpop.permute.xlu0 %595
  %v598 = vadd.f32 %v588, %v596
  %v599 = vtanh.pop %v598
  %601 = vrot.lane.b32.xlu0 %v599, 32
  %v602 = vpop.permute.xlu0 %601
  %v604 = vmul.f32 %v586, %v602
  %v605 = vadd.f32 %v185, %v578
  %v606 = vxor.u32 %v605, 2147483648
  %v607 = vmul.f32 %v606, 1.442695
  %v608 = vpow.pop %v607
  %v609 = vadd.f32 %v608, 1.0
  %v610 = vrcp.pop %v609
  %v611 = vmul.f32 1.0, %v610
  %v612 = vtanh.pop %v605
  %v613 = vmul.f32 %v611, %v490
  %615 = vrot.lane.b32.xlu0 %v612, 32
  %v616 = vpop.permute.xlu0 %615
  %v618 = vmul.f32 %v611, %v616
  %620 = vrot.lane.b32.xlu0 %v618, 32
  %v621 = vpop.permute.xlu0 %620
  %v623 = vadd.f32 %v613, %v621
  %v624 = vtanh.pop %v623
  %626 = vrot.lane.b32.xlu0 %v624, 32
  %v627 = vpop.permute.xlu0 %626
  %v629 = vmul.f32 %v611, %v627
  %631 = vrot.lane.b32.xlu0 %v629, 64
  %v632 = vpop.permute.xlu0 %631
  %635 = vrot.lane.b32.xlu0 %v604, 96
  %v636 = vpop.permute.xlu0 %635
  %v638 = vsel %vm237, %v632, %v636
  %v640 = vsel %vm239, %v638, 0
  %642 = vmatprep.subr.mxu0 0.0
  %643 = vmatpush1.msra.mxu0 0.0
  %644 = vmatprep.subr.mxu0 0.0
  %645 = vmatpush1.msra.mxu0 0.0
  %646 = vmatprep.subr.mxu0 0.0
  %647 = vmatpush1.msra.mxu0 0.0
  %648 = vmatprep.subr.mxu0 0.0
  %649 = vmatpush1.msra.mxu0 0.0
  %650 = vmatprep.subr.mxu0 0.0
  %651 = vmatpush1.msra.mxu0 0.0
  %652 = vmatprep.subr.mxu0 0.0
  %653 = vmatpush1.msra.mxu0 0.0
  %654 = vmatprep.subr.mxu0 0.0
  %655 = vmatpush1.msra.mxu0 0.0
  %656 = vmatprep.subr.mxu0 0.0
  %657 = vmatpush1.msra.mxu0 0.0
  %658 = vmatprep.subr.mxu0 %v47
  %659 = vmatpush1.msra.mxu0 %v46
  %660 = vmatprep.subr.mxu0 %v45
  %661 = vmatpush1.msra.mxu0 %v44
  %662 = vmatprep.subr.mxu0 %v43
  %663 = vmatpush1.msra.mxu0 %v42
  %664 = vmatprep.subr.mxu0 %v41
  %665 = vmatpush1.msra.mxu0 %v40
  %666 = vmatprep.subr.mxu0 %v39
  %667 = vmatpush1.msra.mxu0 %v38
  %668 = vmatprep.subr.mxu0 %v37
  %669 = vmatpush1.msra.mxu0 %v36
  %670 = vmatprep.subr.mxu0 %v35
  %671 = vmatpush1.msra.mxu0 %v34
  %672 = vmatprep.subr.mxu0 %v33
  %673 = vmatpush1.msra.mxu0 %v32
  %674 = vmatprep.subr.mxu0 0.0
  %675 = vmatpush2.msra.mxu0 0.0
  %676 = vmatprep.subr.mxu0 0.0
  %677 = vmatpush2.msra.mxu0 0.0
  %678 = vmatprep.subr.mxu0 0.0
  %679 = vmatpush2.msra.mxu0 0.0
  %680 = vmatprep.subr.mxu0 0.0
  %681 = vmatpush2.msra.mxu0 0.0
  %682 = vmatprep.subr.mxu0 0.0
  %683 = vmatpush2.msra.mxu0 0.0
  %684 = vmatprep.subr.mxu0 0.0
  %685 = vmatpush2.msra.mxu0 0.0
  %686 = vmatprep.subr.mxu0 0.0
  %687 = vmatpush2.msra.mxu0 0.0
  %688 = vmatprep.subr.mxu0 0.0
  %689 = vmatpush2.msra.mxu0 0.0
  %690 = vmatprep.subr.mxu0 0.0
  %691 = vmatpush2.msra.mxu0 0.0
  %692 = vmatprep.subr.mxu0 0.0
  %693 = vmatpush2.msra.mxu0 0.0
  %694 = vmatprep.subr.mxu0 0.0
  %695 = vmatpush2.msra.mxu0 0.0
  %696 = vmatprep.subr.mxu0 0.0
  %697 = vmatpush2.msra.mxu0 0.0
  %698 = vmatprep.subr.mxu0 0.0
  %699 = vmatpush2.msra.mxu0 0.0
  %700 = vmatprep.subr.mxu0 0.0
  %701 = vmatpush2.msra.mxu0 0.0
  %702 = vmatprep.subr.mxu0 0.0
  %703 = vmatpush2.msra.mxu0 0.0
  %704 = vmatprep.subr.mxu0 0.0
  %705 = vmatpush2.msra.mxu0 0.0
  %706 = vmatprep.mubr.f32.mxu0 0.0
  %707 = vmatmul.mubr.f32.gmra.mxu0 %v640
  %v708 = vpop.f32.mrf.mxu0
  %v709 = vadd.f32 0.0, %v708
  %v710 = vpop.f32.mrf.mxu0
  %v711 = vadd.f32 0.0, %v710
  %712 = vdwg.mxu0
  %v713 = vadd.f32 %v709, %v53
  %v714 = vxor.u32 %v713, 2147483648
  %v715 = vmul.f32 %v714, 1.442695
  %v716 = vpow.pop %v715
  %v717 = vadd.f32 %v716, 1.0
  %v718 = vrcp.pop %v717
  %v719 = vmul.f32 1.0, %v718
  %v720 = vtanh.pop %v713
  %v721 = vmul.f32 %v719, %v598
  %723 = vrot.lane.b32.xlu0 %v720, 32
  %v724 = vpop.permute.xlu0 %723
  %v726 = vmul.f32 %v719, %v724
  %728 = vrot.lane.b32.xlu0 %v726, 32
  %v729 = vpop.permute.xlu0 %728
  %v731 = vadd.f32 %v721, %v729
  %v732 = vtanh.pop %v731
  %734 = vrot.lane.b32.xlu0 %v732, 32
  %v735 = vpop.permute.xlu0 %734
  %v737 = vmul.f32 %v719, %v735
  %v738 = vadd.f32 %v190, %v711
  %v739 = vxor.u32 %v738, 2147483648
  %v740 = vmul.f32 %v739, 1.442695
  %v741 = vpow.pop %v740
  %v742 = vadd.f32 %v741, 1.0
  %v743 = vrcp.pop %v742
  %v744 = vmul.f32 1.0, %v743
  %v745 = vtanh.pop %v738
  %v746 = vmul.f32 %v744, %v623
  %748 = vrot.lane.b32.xlu0 %v745, 32
  %v749 = vpop.permute.xlu0 %748
  %v751 = vmul.f32 %v744, %v749
  %753 = vrot.lane.b32.xlu0 %v751, 32
  %v754 = vpop.permute.xlu0 %753
  %v756 = vadd.f32 %v746, %v754
  %v757 = vtanh.pop %v756
  %759 = vrot.lane.b32.xlu0 %v757, 32
  %v760 = vpop.permute.xlu0 %759
  %v762 = vmul.f32 %v744, %v760
  %764 = vrot.lane.b32.xlu0 %v762, 64
  %v765 = vpop.permute.xlu0 %764
  %768 = vrot.lane.b32.xlu0 %v737, 96
  %v769 = vpop.permute.xlu0 %768
  %v771 = vsel %vm237, %v765, %v769
  %v773 = vsel %vm239, %v771, 0
  %775 = vmatprep.subr.mxu0 0.0
  %776 = vmatpush1.msra.mxu0 0.0
  %777 = vmatprep.subr.mxu0 0.0
  %778 = vmatpush1.msra.mxu0 0.0
  %779 = vmatprep.subr.mxu0 0.0
  %780 = vmatpush1.msra.mxu0 0.0
  %781 = vmatprep.subr.mxu0 0.0
  %782 = vmatpush1.msra.mxu0 0.0
  %783 = vmatprep.subr.mxu0 0.0
  %784 = vmatpush1.msra.mxu0 0.0
  %785 = vmatprep.subr.mxu0 0.0
  %786 = vmatpush1.msra.mxu0 0.0
  %787 = vmatprep.subr.mxu0 0.0
  %788 = vmatpush1.msra.mxu0 0.0
  %789 = vmatprep.subr.mxu0 0.0
  %790 = vmatpush1.msra.mxu0 0.0
  %791 = vmatprep.subr.mxu0 %v47
  %792 = vmatpush1.msra.mxu0 %v46
  %793 = vmatprep.subr.mxu0 %v45
  %794 = vmatpush1.msra.mxu0 %v44
  %795 = vmatprep.subr.mxu0 %v43
  %796 = vmatpush1.msra.mxu0 %v42
  %797 = vmatprep.subr.mxu0 %v41
  %798 = vmatpush1.msra.mxu0 %v40
  %799 = vmatprep.subr.mxu0 %v39
  %800 = vmatpush1.msra.mxu0 %v38
  %801 = vmatprep.subr.mxu0 %v37
  %802 = vmatpush1.msra.mxu0 %v36
  %803 = vmatprep.subr.mxu0 %v35
  %804 = vmatpush1.msra.mxu0 %v34
  %805 = vmatprep.subr.mxu0 %v33
  %806 = vmatpush1.msra.mxu0 %v32
  %807 = vmatprep.subr.mxu0 0.0
  %808 = vmatpush2.msra.mxu0 0.0
  %809 = vmatprep.subr.mxu0 0.0
  %810 = vmatpush2.msra.mxu0 0.0
  %811 = vmatprep.subr.mxu0 0.0
  %812 = vmatpush2.msra.mxu0 0.0
  %813 = vmatprep.subr.mxu0 0.0
  %814 = vmatpush2.msra.mxu0 0.0
  %815 = vmatprep.subr.mxu0 0.0
  %816 = vmatpush2.msra.mxu0 0.0
  %817 = vmatprep.subr.mxu0 0.0
  %818 = vmatpush2.msra.mxu0 0.0
  %819 = vmatprep.subr.mxu0 0.0
  %820 = vmatpush2.msra.mxu0 0.0
  %821 = vmatprep.subr.mxu0 0.0
  %822 = vmatpush2.msra.mxu0 0.0
  %823 = vmatprep.subr.mxu0 0.0
  %824 = vmatpush2.msra.mxu0 0.0
  %825 = vmatprep.subr.mxu0 0.0
  %826 = vmatpush2.msra.mxu0 0.0
  %827 = vmatprep.subr.mxu0 0.0
  %828 = vmatpush2.msra.mxu0 0.0
  %829 = vmatprep.subr.mxu0 0.0
  %830 = vmatpush2.msra.mxu0 0.0
  %831 = vmatprep.subr.mxu0 0.0
  %832 = vmatpush2.msra.mxu0 0.0
  %833 = vmatprep.subr.mxu0 0.0
  %834 = vmatpush2.msra.mxu0 0.0
  %835 = vmatprep.subr.mxu0 0.0
  %836 = vmatpush2.msra.mxu0 0.0
  %837 = vmatprep.subr.mxu0 0.0
  %838 = vmatpush2.msra.mxu0 0.0
  %839 = vmatprep.mubr.f32.mxu0 0.0
  %840 = vmatmul.mubr.f32.gmra.mxu0 %v773
  %v841 = vpop.f32.mrf.mxu0
  %v842 = vadd.f32 0.0, %v841
  %v843 = vpop.f32.mrf.mxu0
  %v844 = vadd.f32 0.0, %v843
  %845 = vdwg.mxu0
  %v846 = vadd.f32 %v842, %v53
  %v847 = vxor.u32 %v846, 2147483648
  %v848 = vmul.f32 %v847, 1.442695
  %v849 = vpow.pop %v848
  %v850 = vadd.f32 %v849, 1.0
  %v851 = vrcp.pop %v850
  %v852 = vmul.f32 1.0, %v851
  %v853 = vtanh.pop %v846
  %v854 = vmul.f32 %v852, %v731
  %856 = vrot.lane.b32.xlu0 %v853, 32
  %v857 = vpop.permute.xlu0 %856
  %v859 = vmul.f32 %v852, %v857
  %861 = vrot.lane.b32.xlu0 %v859, 32
  %v862 = vpop.permute.xlu0 %861
  %v864 = vadd.f32 %v854, %v862
  %v865 = vtanh.pop %v864
  %867 = vrot.lane.b32.xlu0 %v865, 32
  %v868 = vpop.permute.xlu0 %867
  %v870 = vmul.f32 %v852, %v868
  %v871 = vadd.f32 %v195, %v844
  %v872 = vxor.u32 %v871, 2147483648
  %v873 = vmul.f32 %v872, 1.442695
  %v874 = vpow.pop %v873
  %v875 = vadd.f32 %v874, 1.0
  %v876 = vrcp.pop %v875
  %v877 = vmul.f32 1.0, %v876
  %v878 = vtanh.pop %v871
  %v879 = vmul.f32 %v877, %v756
  %881 = vrot.lane.b32.xlu0 %v878, 32
  %v882 = vpop.permute.xlu0 %881
  %v884 = vmul.f32 %v877, %v882
  %886 = vrot.lane.b32.xlu0 %v884, 32
  %v887 = vpop.permute.xlu0 %886
  %v889 = vadd.f32 %v879, %v887
  %v890 = vtanh.pop %v889
  %892 = vrot.lane.b32.xlu0 %v890, 32
  %v893 = vpop.permute.xlu0 %892
  %v895 = vmul.f32 %v877, %v893
  %897 = vrot.lane.b32.xlu0 %v895, 64
  %v898 = vpop.permute.xlu0 %897
  %901 = vrot.lane.b32.xlu0 %v870, 96
  %v902 = vpop.permute.xlu0 %901
  %v904 = vsel %vm237, %v898, %v902
  %v906 = vsel %vm239, %v904, 0
  %908 = vmatprep.subr.mxu0 0.0
  %909 = vmatpush1.msra.mxu0 0.0
  %910 = vmatprep.subr.mxu0 0.0
  %911 = vmatpush1.msra.mxu0 0.0
  %912 = vmatprep.subr.mxu0 0.0
  %913 = vmatpush1.msra.mxu0 0.0
  %914 = vmatprep.subr.mxu0 0.0
  %915 = vmatpush1.msra.mxu0 0.0
  %916 = vmatprep.subr.mxu0 0.0
  %917 = vmatpush1.msra.mxu0 0.0
  %918 = vmatprep.subr.mxu0 0.0
  %919 = vmatpush1.msra.mxu0 0.0
  %920 = vmatprep.subr.mxu0 0.0
  %921 = vmatpush1.msra.mxu0 0.0
  %922 = vmatprep.subr.mxu0 0.0
  %923 = vmatpush1.msra.mxu0 0.0
  %924 = vmatprep.subr.mxu0 %v47
  %925 = vmatpush1.msra.mxu0 %v46
  %926 = vmatprep.subr.mxu0 %v45
  %927 = vmatpush1.msra.mxu0 %v44
  %928 = vmatprep.subr.mxu0 %v43
  %929 = vmatpush1.msra.mxu0 %v42
  %930 = vmatprep.subr.mxu0 %v41
  %931 = vmatpush1.msra.mxu0 %v40
  %932 = vmatprep.subr.mxu0 %v39
  %933 = vmatpush1.msra.mxu0 %v38
  %934 = vmatprep.subr.mxu0 %v37
  %935 = vmatpush1.msra.mxu0 %v36
  %936 = vmatprep.subr.mxu0 %v35
  %937 = vmatpush1.msra.mxu0 %v34
  %938 = vmatprep.subr.mxu0 %v33
  %939 = vmatpush1.msra.mxu0 %v32
  %940 = vmatprep.subr.mxu0 0.0
  %941 = vmatpush2.msra.mxu0 0.0
  %942 = vmatprep.subr.mxu0 0.0
  %943 = vmatpush2.msra.mxu0 0.0
  %944 = vmatprep.subr.mxu0 0.0
  %945 = vmatpush2.msra.mxu0 0.0
  %946 = vmatprep.subr.mxu0 0.0
  %947 = vmatpush2.msra.mxu0 0.0
  %948 = vmatprep.subr.mxu0 0.0
  %949 = vmatpush2.msra.mxu0 0.0
  %950 = vmatprep.subr.mxu0 0.0
  %951 = vmatpush2.msra.mxu0 0.0
  %952 = vmatprep.subr.mxu0 0.0
  %953 = vmatpush2.msra.mxu0 0.0
  %954 = vmatprep.subr.mxu0 0.0
  %955 = vmatpush2.msra.mxu0 0.0
  %956 = vmatprep.subr.mxu0 0.0
  %957 = vmatpush2.msra.mxu0 0.0
  %958 = vmatprep.subr.mxu0 0.0
  %959 = vmatpush2.msra.mxu0 0.0
  %960 = vmatprep.subr.mxu0 0.0
  %961 = vmatpush2.msra.mxu0 0.0
  %962 = vmatprep.subr.mxu0 0.0
  %963 = vmatpush2.msra.mxu0 0.0
  %964 = vmatprep.subr.mxu0 0.0
  %965 = vmatpush2.msra.mxu0 0.0
  %966 = vmatprep.subr.mxu0 0.0
  %967 = vmatpush2.msra.mxu0 0.0
  %968 = vmatprep.subr.mxu0 0.0
  %969 = vmatpush2.msra.mxu0 0.0
  %970 = vmatprep.subr.mxu0 0.0
  %971 = vmatpush2.msra.mxu0 0.0
  %972 = vmatprep.mubr.f32.mxu0 0.0
  %973 = vmatmul.mubr.f32.gmra.mxu0 %v906
  %v974 = vpop.f32.mrf.mxu0
  %v975 = vadd.f32 0.0, %v974
  %v976 = vpop.f32.mrf.mxu0
  %v977 = vadd.f32 0.0, %v976
  %978 = vdwg.mxu0
  %v979 = vadd.f32 %v975, %v53
  %v980 = vxor.u32 %v979, 2147483648
  %v981 = vmul.f32 %v980, 1.442695
  %v982 = vpow.pop %v981
  %v983 = vadd.f32 %v982, 1.0
  %v984 = vrcp.pop %v983
  %v985 = vmul.f32 1.0, %v984
  %v986 = vtanh.pop %v979
  %v987 = vmul.f32 %v985, %v864
  %989 = vrot.lane.b32.xlu0 %v986, 32
  %v990 = vpop.permute.xlu0 %989
  %v992 = vmul.f32 %v985, %v990
  %994 = vrot.lane.b32.xlu0 %v992, 32
  %v995 = vpop.permute.xlu0 %994
  %v997 = vadd.f32 %v987, %v995
  %v998 = vtanh.pop %v997
  %1000 = vrot.lane.b32.xlu0 %v998, 32
  %v1001 = vpop.permute.xlu0 %1000
  %v1003 = vmul.f32 %v985, %v1001
  %v1004 = vadd.f32 %v200, %v977
  %v1005 = vxor.u32 %v1004, 2147483648
  %v1006 = vmul.f32 %v1005, 1.442695
  %v1007 = vpow.pop %v1006
  %v1008 = vadd.f32 %v1007, 1.0
  %v1009 = vrcp.pop %v1008
  %v1010 = vmul.f32 1.0, %v1009
  %v1011 = vtanh.pop %v1004
  %v1012 = vmul.f32 %v1010, %v889
  %1014 = vrot.lane.b32.xlu0 %v1011, 32
  %v1015 = vpop.permute.xlu0 %1014
  %v1017 = vmul.f32 %v1010, %v1015
  %1019 = vrot.lane.b32.xlu0 %v1017, 32
  %v1020 = vpop.permute.xlu0 %1019
  %v1022 = vadd.f32 %v1012, %v1020
  %v1023 = vtanh.pop %v1022
  %1025 = vrot.lane.b32.xlu0 %v1023, 32
  %v1026 = vpop.permute.xlu0 %1025
  %v1028 = vmul.f32 %v1010, %v1026
  %1030 = vrot.lane.b32.xlu0 %v1028, 64
  %v1031 = vpop.permute.xlu0 %1030
  %1034 = vrot.lane.b32.xlu0 %v1003, 96
  %v1035 = vpop.permute.xlu0 %1034
  %v1037 = vsel %vm237, %v1031, %v1035
  %v1039 = vsel %vm239, %v1037, 0
  %1041 = vmatprep.subr.mxu0 0.0
  %1042 = vmatpush1.msra.mxu0 0.0
  %1043 = vmatprep.subr.mxu0 0.0
  %1044 = vmatpush1.msra.mxu0 0.0
  %1045 = vmatprep.subr.mxu0 0.0
  %1046 = vmatpush1.msra.mxu0 0.0
  %1047 = vmatprep.subr.mxu0 0.0
  %1048 = vmatpush1.msra.mxu0 0.0
  %1049 = vmatprep.subr.mxu0 0.0
  %1050 = vmatpush1.msra.mxu0 0.0
  %1051 = vmatprep.subr.mxu0 0.0
  %1052 = vmatpush1.msra.mxu0 0.0
  %1053 = vmatprep.subr.mxu0 0.0
  %1054 = vmatpush1.msra.mxu0 0.0
  %1055 = vmatprep.subr.mxu0 0.0
  %1056 = vmatpush1.msra.mxu0 0.0
  %1057 = vmatprep.subr.mxu0 %v47
  %1058 = vmatpush1.msra.mxu0 %v46
  %1059 = vmatprep.subr.mxu0 %v45
  %1060 = vmatpush1.msra.mxu0 %v44
  %1061 = vmatprep.subr.mxu0 %v43
  %1062 = vmatpush1.msra.mxu0 %v42
  %1063 = vmatprep.subr.mxu0 %v41
  %1064 = vmatpush1.msra.mxu0 %v40
  %1065 = vmatprep.subr.mxu0 %v39
  %1066 = vmatpush1.msra.mxu0 %v38
  %1067 = vmatprep.subr.mxu0 %v37
  %1068 = vmatpush1.msra.mxu0 %v36
  %1069 = vmatprep.subr.mxu0 %v35
  %1070 = vmatpush1.msra.mxu0 %v34
  %1071 = vmatprep.subr.mxu0 %v33
  %1072 = vmatpush1.msra.mxu0 %v32
  %1073 = vmatprep.subr.mxu0 0.0
  %1074 = vmatpush2.msra.mxu0 0.0
  %1075 = vmatprep.subr.mxu0 0.0
  %1076 = vmatpush2.msra.mxu0 0.0
  %1077 = vmatprep.subr.mxu0 0.0
  %1078 = vmatpush2.msra.mxu0 0.0
  %1079 = vmatprep.subr.mxu0 0.0
  %1080 = vmatpush2.msra.mxu0 0.0
  %1081 = vmatprep.subr.mxu0 0.0
  %1082 = vmatpush2.msra.mxu0 0.0
  %1083 = vmatprep.subr.mxu0 0.0
  %1084 = vmatpush2.msra.mxu0 0.0
  %1085 = vmatprep.subr.mxu0 0.0
  %1086 = vmatpush2.msra.mxu0 0.0
  %1087 = vmatprep.subr.mxu0 0.0
  %1088 = vmatpush2.msra.mxu0 0.0
  %1089 = vmatprep.subr.mxu0 0.0
  %1090 = vmatpush2.msra.mxu0 0.0
  %1091 = vmatprep.subr.mxu0 0.0
  %1092 = vmatpush2.msra.mxu0 0.0
  %1093 = vmatprep.subr.mxu0 0.0
  %1094 = vmatpush2.msra.mxu0 0.0
  %1095 = vmatprep.subr.mxu0 0.0
  %1096 = vmatpush2.msra.mxu0 0.0
  %1097 = vmatprep.subr.mxu0 0.0
  %1098 = vmatpush2.msra.mxu0 0.0
  %1099 = vmatprep.subr.mxu0 0.0
  %1100 = vmatpush2.msra.mxu0 0.0
  %1101 = vmatprep.subr.mxu0 0.0
  %1102 = vmatpush2.msra.mxu0 0.0
  %1103 = vmatprep.subr.mxu0 0.0
  %1104 = vmatpush2.msra.mxu0 0.0
  %1105 = vmatprep.mubr.f32.mxu0 0.0
  %1106 = vmatmul.mubr.f32.gmra.mxu0 %v1039
  %v1107 = vpop.f32.mrf.mxu0
  %v1108 = vadd.f32 0.0, %v1107
  %v1109 = vpop.f32.mrf.mxu0
  %v1110 = vadd.f32 0.0, %v1109
  %1111 = vdwg.mxu0
  %v1112 = vadd.f32 %v1108, %v53
  %v1113 = vxor.u32 %v1112, 2147483648
  %v1114 = vmul.f32 %v1113, 1.442695
  %v1115 = vpow.pop %v1114
  %v1116 = vadd.f32 %v1115, 1.0
  %v1117 = vrcp.pop %v1116
  %v1118 = vmul.f32 1.0, %v1117
  %v1119 = vtanh.pop %v1112
  %v1120 = vmul.f32 %v1118, %v997
  %1122 = vrot.lane.b32.xlu0 %v1119, 32
  %v1123 = vpop.permute.xlu0 %1122
  %v1125 = vmul.f32 %v1118, %v1123
  %1127 = vrot.lane.b32.xlu0 %v1125, 32
  %v1128 = vpop.permute.xlu0 %1127
  %v1130 = vadd.f32 %v1120, %v1128
  %v1131 = vtanh.pop %v1130
  %1133 = vrot.lane.b32.xlu0 %v1131, 32
  %v1134 = vpop.permute.xlu0 %1133
  %v1136 = vmul.f32 %v1118, %v1134
  %v1137 = vadd.f32 %v205, %v1110
  %v1138 = vxor.u32 %v1137, 2147483648
  %v1139 = vmul.f32 %v1138, 1.442695
  %v1140 = vpow.pop %v1139
  %v1141 = vadd.f32 %v1140, 1.0
  %v1142 = vrcp.pop %v1141
  %v1143 = vmul.f32 1.0, %v1142
  %v1144 = vtanh.pop %v1137
  %v1145 = vmul.f32 %v1143, %v1022
  %1147 = vrot.lane.b32.xlu0 %v1144, 32
  %v1148 = vpop.permute.xlu0 %1147
  %v1150 = vmul.f32 %v1143, %v1148
  %1152 = vrot.lane.b32.xlu0 %v1150, 32
  %v1153 = vpop.permute.xlu0 %1152
  %v1155 = vadd.f32 %v1145, %v1153
  %v1156 = vtanh.pop %v1155
  %1158 = vrot.lane.b32.xlu0 %v1156, 32
  %v1159 = vpop.permute.xlu0 %1158
  %v1161 = vmul.f32 %v1143, %v1159
  %1163 = vrot.lane.b32.xlu0 %v1161, 64
  %v1164 = vpop.permute.xlu0 %1163
  %1167 = vrot.lane.b32.xlu0 %v1136, 96
  %v1168 = vpop.permute.xlu0 %1167
  %v1170 = vsel %vm237, %v1164, %v1168
  %v1172 = vsel %vm239, %v1170, 0
  %1174 = vmatprep.subr.mxu0 0.0
  %1175 = vmatpush1.msra.mxu0 0.0
  %1176 = vmatprep.subr.mxu0 0.0
  %1177 = vmatpush1.msra.mxu0 0.0
  %1178 = vmatprep.subr.mxu0 0.0
  %1179 = vmatpush1.msra.mxu0 0.0
  %1180 = vmatprep.subr.mxu0 0.0
  %1181 = vmatpush1.msra.mxu0 0.0
  %1182 = vmatprep.subr.mxu0 0.0
  %1183 = vmatpush1.msra.mxu0 0.0
  %1184 = vmatprep.subr.mxu0 0.0
  %1185 = vmatpush1.msra.mxu0 0.0
  %1186 = vmatprep.subr.mxu0 0.0
  %1187 = vmatpush1.msra.mxu0 0.0
  %1188 = vmatprep.subr.mxu0 0.0
  %1189 = vmatpush1.msra.mxu0 0.0
  %1190 = vmatprep.subr.mxu0 %v47
  %1191 = vmatpush1.msra.mxu0 %v46
  %1192 = vmatprep.subr.mxu0 %v45
  %1193 = vmatpush1.msra.mxu0 %v44
  %1194 = vmatprep.subr.mxu0 %v43
  %1195 = vmatpush1.msra.mxu0 %v42
  %1196 = vmatprep.subr.mxu0 %v41
  %1197 = vmatpush1.msra.mxu0 %v40
  %1198 = vmatprep.subr.mxu0 %v39
  %1199 = vmatpush1.msra.mxu0 %v38
  %1200 = vmatprep.subr.mxu0 %v37
  %1201 = vmatpush1.msra.mxu0 %v36
  %1202 = vmatprep.subr.mxu0 %v35
  %1203 = vmatpush1.msra.mxu0 %v34
  %1204 = vmatprep.subr.mxu0 %v33
  %1205 = vmatpush1.msra.mxu0 %v32
  %1206 = vmatprep.subr.mxu0 0.0
  %1207 = vmatpush2.msra.mxu0 0.0
  %1208 = vmatprep.subr.mxu0 0.0
  %1209 = vmatpush2.msra.mxu0 0.0
  %1210 = vmatprep.subr.mxu0 0.0
  %1211 = vmatpush2.msra.mxu0 0.0
  %1212 = vmatprep.subr.mxu0 0.0
  %1213 = vmatpush2.msra.mxu0 0.0
  %1214 = vmatprep.subr.mxu0 0.0
  %1215 = vmatpush2.msra.mxu0 0.0
  %1216 = vmatprep.subr.mxu0 0.0
  %1217 = vmatpush2.msra.mxu0 0.0
  %1218 = vmatprep.subr.mxu0 0.0
  %1219 = vmatpush2.msra.mxu0 0.0
  %1220 = vmatprep.subr.mxu0 0.0
  %1221 = vmatpush2.msra.mxu0 0.0
  %1222 = vmatprep.subr.mxu0 0.0
  %1223 = vmatpush2.msra.mxu0 0.0
  %1224 = vmatprep.subr.mxu0 0.0
  %1225 = vmatpush2.msra.mxu0 0.0
  %1226 = vmatprep.subr.mxu0 0.0
  %1227 = vmatpush2.msra.mxu0 0.0
  %1228 = vmatprep.subr.mxu0 0.0
  %1229 = vmatpush2.msra.mxu0 0.0
  %1230 = vmatprep.subr.mxu0 0.0
  %1231 = vmatpush2.msra.mxu0 0.0
  %1232 = vmatprep.subr.mxu0 0.0
  %1233 = vmatpush2.msra.mxu0 0.0
  %1234 = vmatprep.subr.mxu0 0.0
  %1235 = vmatpush2.msra.mxu0 0.0
  %1236 = vmatprep.subr.mxu0 0.0
  %1237 = vmatpush2.msra.mxu0 0.0
  %1238 = vmatprep.mubr.f32.mxu0 0.0
  %1239 = vmatmul.mubr.f32.gmra.mxu0 %v1172
  %v1240 = vpop.f32.mrf.mxu0
  %v1241 = vadd.f32 0.0, %v1240
  %v1242 = vpop.f32.mrf.mxu0
  %1243 = vdwg.mxu0
  %v1244 = vadd.f32 %v1241, %v53
  %v1245 = vxor.u32 %v1244, 2147483648
  %v1246 = vmul.f32 %v1245, 1.442695
  %v1247 = vpow.pop %v1246
  %v1248 = vadd.f32 %v1247, 1.0
  %v1249 = vrcp.pop %v1248
  %v1250 = vmul.f32 1.0, %v1249
  %v1251 = vtanh.pop %v1244
  %v1252 = vmul.f32 %v1250, %v1130
  %1254 = vrot.lane.b32.xlu0 %v1251, 32
  %v1255 = vpop.permute.xlu0 %1254
  %v1257 = vmul.f32 %v1250, %v1255
  %1259 = vrot.lane.b32.xlu0 %v1257, 32
  %v1260 = vpop.permute.xlu0 %1259
  %v1262 = vadd.f32 %v1252, %v1260
  %v1263 = vtanh.pop %v1262
  %1265 = vrot.lane.b32.xlu0 %v1263, 32
  %v1266 = vpop.permute.xlu0 %1265
  %v1268 = vmul.f32 %v1250, %v1266
  %v1269 = vld [vmem:[%s6] sm:$0x1]
  %v1271 = vlaneseq
  %v1272 = vshrl.u32 %v1271, 7
  %v1273 = vsub.s32 0, %v1272
  %v1274 = vrot.slane %v1269, %v1273
  %1277 = vrot.lane.b32.xlu0 %v1268, 64
  %v1278 = vpop.permute.xlu0 %1277
  %v1279 = vsel %vm237, %v1278, 0
  %1281 = vmatprep.subr.mxu0 0.0
  %1282 = vmatpush1.msra.mxu0 0.0
  %1283 = vmatprep.subr.mxu0 0.0
  %1284 = vmatpush1.msra.mxu0 0.0
  %1285 = vmatprep.subr.mxu0 0.0
  %1286 = vmatpush1.msra.mxu0 0.0
  %1287 = vmatprep.subr.mxu0 0.0
  %1288 = vmatpush1.msra.mxu0 0.0
  %1289 = vmatprep.subr.mxu0 0.0
  %1290 = vmatpush1.msra.mxu0 0.0
  %1291 = vmatprep.subr.mxu0 0.0
  %1292 = vmatpush1.msra.mxu0 0.0
  %1293 = vmatprep.subr.mxu0 0.0
  %1294 = vmatpush1.msra.mxu0 0.0
  %1295 = vmatprep.subr.mxu0 0.0
  %1296 = vmatpush1.msra.mxu0 0.0
  %1297 = vmatprep.subr.mxu0 0.0
  %1298 = vmatpush1.msra.mxu0 0.0
  %1299 = vmatprep.subr.mxu0 0.0
  %1300 = vmatpush1.msra.mxu0 0.0
  %1301 = vmatprep.subr.mxu0 0.0
  %1302 = vmatpush1.msra.mxu0 0.0
  %1303 = vmatprep.subr.mxu0 0.0
  %1304 = vmatpush1.msra.mxu0 0.0
  %1305 = vmatprep.subr.mxu0 0.0
  %1306 = vmatpush1.msra.mxu0 %v58
  %1307 = vmatprep.subr.mxu0 0.0
  %1308 = vmatpush1.msra.mxu0 %v57
  %1309 = vmatprep.subr.mxu0 0.0
  %1310 = vmatpush1.msra.mxu0 %v56
  %1311 = vmatprep.subr.mxu0 0.0
  %1312 = vmatpush1.msra.mxu0 %v55
  %1313 = vmatprep.subr.mxu0 0.0
  %1314 = vmatpush2.msra.mxu0 0.0
  %1315 = vmatprep.subr.mxu0 0.0
  %1316 = vmatpush2.msra.mxu0 0.0
  %1317 = vmatprep.subr.mxu0 0.0
  %1318 = vmatpush2.msra.mxu0 0.0
  %1319 = vmatprep.subr.mxu0 0.0
  %1320 = vmatpush2.msra.mxu0 0.0
  %1321 = vmatprep.subr.mxu0 0.0
  %1322 = vmatpush2.msra.mxu0 0.0
  %1323 = vmatprep.subr.mxu0 0.0
  %1324 = vmatpush2.msra.mxu0 0.0
  %1325 = vmatprep.subr.mxu0 0.0
  %1326 = vmatpush2.msra.mxu0 0.0
  %1327 = vmatprep.subr.mxu0 0.0
  %1328 = vmatpush2.msra.mxu0 0.0
  %1329 = vmatprep.subr.mxu0 0.0
  %1330 = vmatpush2.msra.mxu0 0.0
  %1331 = vmatprep.subr.mxu0 0.0
  %1332 = vmatpush2.msra.mxu0 0.0
  %1333 = vmatprep.subr.mxu0 0.0
  %1334 = vmatpush2.msra.mxu0 0.0
  %1335 = vmatprep.subr.mxu0 0.0
  %1336 = vmatpush2.msra.mxu0 0.0
  %1337 = vmatprep.subr.mxu0 0.0
  %1338 = vmatpush2.msra.mxu0 0.0
  %1339 = vmatprep.subr.mxu0 0.0
  %1340 = vmatpush2.msra.mxu0 0.0
  %1341 = vmatprep.subr.mxu0 0.0
  %1342 = vmatpush2.msra.mxu0 0.0
  %1343 = vmatprep.subr.mxu0 0.0
  %1344 = vmatpush2.msra.mxu0 0.0
  %1345 = vmatprep.mubr.f32.mxu0 0.0
  %1346 = vmatmul.mubr.f32.gmra.mxu0 %v1279
  %v1347 = vpop.f32.mrf.mxu0
  %v1348 = vadd.f32 %v1274, %v1347
  %v1349 = vpop.f32.mrf.mxu0
  %1350 = vdwg.mxu0
  %v1351 = vmax.f32 %v1348, 0.0
  %v1352 = vld [vmem:[%s8] sm:$0x1]
  %v1354 = vlaneseq
  %v1355 = vshrl.u32 %v1354, 7
  %v1356 = vsub.s32 0, %v1355
  %v1357 = vrot.slane %v1352, %v1356
  %v1360 = vsel %vm78, %v1351, 0
  %1362 = vmatprep.subr.mxu0 0.0
  %1363 = vmatpush1.msra.mxu0 0.0
  %1364 = vmatprep.subr.mxu0 0.0
  %1365 = vmatpush1.msra.mxu0 0.0
  %1366 = vmatprep.subr.mxu0 0.0
  %1367 = vmatpush1.msra.mxu0 0.0
  %1368 = vmatprep.subr.mxu0 0.0
  %1369 = vmatpush1.msra.mxu0 0.0
  %1370 = vmatprep.subr.mxu0 0.0
  %1371 = vmatpush1.msra.mxu0 0.0
  %1372 = vmatprep.subr.mxu0 0.0
  %1373 = vmatpush1.msra.mxu0 0.0
  %1374 = vmatprep.subr.mxu0 0.0
  %1375 = vmatpush1.msra.mxu0 0.0
  %1376 = vmatprep.subr.mxu0 0.0
  %1377 = vmatpush1.msra.mxu0 0.0
  %1378 = vmatprep.subr.mxu0 0.0
  %1379 = vmatpush1.msra.mxu0 0.0
  %1380 = vmatprep.subr.mxu0 0.0
  %1381 = vmatpush1.msra.mxu0 0.0
  %1382 = vmatprep.subr.mxu0 0.0
  %1383 = vmatpush1.msra.mxu0 0.0
  %1384 = vmatprep.subr.mxu0 0.0
  %1385 = vmatpush1.msra.mxu0 0.0
  %1386 = vmatprep.subr.mxu0 0.0
  %1387 = vmatpush1.msra.mxu0 0.0
  %1388 = vmatprep.subr.mxu0 0.0
  %1389 = vmatpush1.msra.mxu0 0.0
  %1390 = vmatprep.subr.mxu0 0.0
  %1391 = vmatpush1.msra.mxu0 %v60
  %1392 = vmatprep.subr.mxu0 0.0
  %1393 = vmatpush1.msra.mxu0 %v59
  %1394 = vmatprep.subr.mxu0 0.0
  %1395 = vmatpush2.msra.mxu0 0.0
  %1396 = vmatprep.subr.mxu0 0.0
  %1397 = vmatpush2.msra.mxu0 0.0
  %1398 = vmatprep.subr.mxu0 0.0
  %1399 = vmatpush2.msra.mxu0 0.0
  %1400 = vmatprep.subr.mxu0 0.0
  %1401 = vmatpush2.msra.mxu0 0.0
  %1402 = vmatprep.subr.mxu0 0.0
  %1403 = vmatpush2.msra.mxu0 0.0
  %1404 = vmatprep.subr.mxu0 0.0
  %1405 = vmatpush2.msra.mxu0 0.0
  %1406 = vmatprep.subr.mxu0 0.0
  %1407 = vmatpush2.msra.mxu0 0.0
  %1408 = vmatprep.subr.mxu0 0.0
  %1409 = vmatpush2.msra.mxu0 0.0
  %1410 = vmatprep.subr.mxu0 0.0
  %1411 = vmatpush2.msra.mxu0 0.0
  %1412 = vmatprep.subr.mxu0 0.0
  %1413 = vmatpush2.msra.mxu0 0.0
  %1414 = vmatprep.subr.mxu0 0.0
  %1415 = vmatpush2.msra.mxu0 0.0
  %1416 = vmatprep.subr.mxu0 0.0
  %1417 = vmatpush2.msra.mxu0 0.0
  %1418 = vmatprep.subr.mxu0 0.0
  %1419 = vmatpush2.msra.mxu0 0.0
  %1420 = vmatprep.subr.mxu0 0.0
  %1421 = vmatpush2.msra.mxu0 0.0
  %1422 = vmatprep.subr.mxu0 0.0
  %1423 = vmatpush2.msra.mxu0 0.0
  %1424 = vmatprep.subr.mxu0 0.0
  %1425 = vmatpush2.msra.mxu0 0.0
  %1426 = vmatprep.mubr.f32.mxu0 0.0
  %1427 = vmatmul.mubr.f32.gmra.mxu0 %v1360
  %v1428 = vpop.f32.mrf.mxu0
  %v1429 = vadd.f32 %v1357, %v1428
  %v1430 = vpop.f32.mrf.mxu0
  %1431 = vdwg.mxu0
  %vm1432 = vcmask 64512
  %1433 = vst.msk [vmem:[%s9] sm:$0xff] %vm1432, %v1429
  // Predicated region
  $region38: #{lstm_classifier_forward.1} parent=0 // pred_check
    _
  $region39: #{lstm_classifier_forward.1} parent=0 // pred_check_branch
    %1435 = sbr.rel (0) target = $region41
  $region40: #{lstm_classifier_forward.1} parent=0 // pred_region
    _
  $region41: #{lstm_classifier_forward.1} parent=0 // pred_fallthru
    _
  // Predicated region
  $region42: #{lstm_classifier_forward.1} parent=0 // pred_check
    _
  $region43: #{lstm_classifier_forward.1} parent=0 // pred_check_branch
    %1437 = sbr.rel (0) target = $region45
  $region44: #{lstm_classifier_forward.1} parent=0 // pred_region
    _
  $region45: #{lstm_classifier_forward.1} parent=0 // pred_fallthru
    _

</llo_original>
